<compile_context>
chip_gen: v6e
topology: v6e:2x2x1
jax: 0.10.0
libtpu: 0.0.40
codegen_flags: <defaults>
</compile_context>

<pallas_src>
import functools
import math

import jax
import jax.numpy as jnp
import numpy as np
from jax.experimental import pallas as pl
from jax.experimental.pallas import tpu as pltpu


def _round_up(x, m):
    return ((x + m - 1) // m) * m


def _vmem_budget_and_limit():
    """Per-generation VMEM numbers: (scratch/tile budget, Mosaic vmem_limit_bytes)."""
    cap = 64 * 1024 * 1024                       # conservative default (v7x-sized)
    try:
        info = pltpu.get_tpu_info()
        cap = int(getattr(info, "vmem_capacity_bytes", cap)) or cap
    except Exception:
        pass
    # 96 MiB limit on the 128 MiB parts (v5e / v6e), 48 MiB on v7x's 64 MiB.
    limit = min(int(cap * 3 // 4), 100 * 1024 * 1024)
    budget = max(limit - 8 * 1024 * 1024, limit // 2)   # headroom for Mosaic internals
    return budget, limit


def _const_spec(block_shape, index_map, single_buffer):
    """BlockSpec for an operand whose block index never changes across the grid."""
    if single_buffer:
        return pl.BlockSpec(block_shape, index_map, pipeline_mode=pl.Buffered(1))
    return pl.BlockSpec(block_shape, index_map)


def _choose_tile_h(H, W, Wp, cin_p, cout_p, T, budget, batch, w_copies):
    """Largest tile_h (multiple of 8 // gcd(W, 8), so tile_h*W % 8 == 0) that fits VMEM."""
    th_step = 8 // math.gcd(W, 8)
    max_th = _round_up(H, th_step)
    if batch == 1:
        # keep at least 2 grid steps so both v7x TensorCores get work
        max_th = max(th_step, _round_up((H + 1) // 2, th_step))
    const_bytes = (w_copies * T * cin_p * cout_p * 2        # weight block(s), bf16
                   + 4 * 8 * cout_p * 4)                    # scale / bias (+ copies)
    best = th_step
    th = th_step
    while th <= max_th and th * W <= 8192:
        need = (2 * th * _round_up(Wp, 16) * cin_p * 2      # per-kh slab, double-buffered bf16
                + _round_up(th * W, 8) * cout_p * 4         # f32 accumulator
                + 2 * _round_up(th * W, 16) * cout_p * 2    # output block, double-buffered bf16
                + const_bytes)
        if need <= budget:
            best = th
        th += th_step
    return best


def _choose_tm(M, cin_p, cout_p, budget, w_copies):
    """Row-tile for the flattened 1x1 path."""
    best = min(256, _round_up(M, 8))
    for tm in (256, 512, 1024, 2048, 4096):
        if tm > _round_up(M, 8):
            break
        need = (2 * tm * cin_p * 2 + 2 * tm * cout_p * 2
                + w_copies * cin_p * cout_p * 2 + 4 * 8 * cout_p * 4)
        if need <= budget:
            best = tm
    return best


# --------------------------------------------------------------------------
# Kernels
# --------------------------------------------------------------------------

def _aspp_dilated_kernel(x_hbm, w_ref, scale_ref, bias_ref, o_ref,
                         slab, copy_sem, acc_ref,
                         *, KH, KW, tile_h, W, rate, cin_p):
    # x_hbm : (B, Hp, Wp, cin_p)   bf16, raw HBM ref (memory_space=pl.ANY)
    # w_ref : (T, cin_p, cout_p)   bf16 VMEM (constant block)
    # scale_ref / bias_ref : (1, cout_p) f32 VMEM (folded eval-mode BN)
    # o_ref : (tile_h*W, cout_p)   flat lane-dense output block (bf16)
    # slab  : (2, tile_h, Wp, cin_p) bf16 VMEM, per-kh row slab, double-buffered
    # copy_sem : (2,) DMA semaphores
    # acc_ref  : (tile_h*W, cout_p) f32 accumulator
    b = pl.program_id(0)
    h0 = pl.program_id(1) * tile_h

    def slab_copy(kh, slot):
        return pltpu.make_async_copy(
            x_hbm.at[b, pl.ds(h0 + kh * rate, tile_h), :, :],
            slab.at[slot],
            copy_sem.at[slot])

    copies = {0: slab_copy(0, 0)}
    copies[0].start()

    # Static (<= 3 iteration) loop over kernel rows: wait the current row slab,
    # prefetch the next row slab into the other slot, then run the KW tap
    # matmuls that all reuse this slab (input HBM reads: KHx, not KH*KWx).
    for kh in range(KH):
        slot = kh & 1
        copies[kh].wait()
        if kh + 1 < KH:
            copies[kh + 1] = slab_copy(kh + 1, 1 - slot)
            copies[kh + 1].start()
        for kw in range(KW):
            t = kh * KW + kw
            # Static kw-shifted window out of the slab.  The reshape is a pure
            # layout no-op when W % 16 == 0 (bf16 sublane tile); otherwise
            # Mosaic inserts a VMEM relayout copy (known secondary cost).
            x_t = slab[slot, :, kw * rate:kw * rate + W, :]
            x_t = x_t.reshape(tile_h * W, cin_p)
            partial = jnp.dot(x_t, w_ref[t], preferred_element_type=jnp.float32)
            if t == 0:
                acc_ref[...] = partial
            else:
                acc_ref[...] += partial

    # Fused eval-mode BN + ReLU epilogue in f32; lane-dense bf16 store.
    y = acc_ref[...] * scale_ref[...] + bias_ref[...]
    o_ref[...] = jnp.maximum(y, 0.0).astype(o_ref.dtype)


def _aspp_pointwise_kernel(x_ref, w_ref, scale_ref, bias_ref, o_ref):
    # 1x1 conv path: plain auto-pipelined flat matmul + BN + ReLU.
    y = jnp.dot(x_ref[...], w_ref[...], preferred_element_type=jnp.float32)
    y = y * scale_ref[...] + bias_ref[...]
    o_ref[...] = jnp.maximum(y, 0.0).astype(o_ref.dtype)


# --------------------------------------------------------------------------
# Wrapper
# --------------------------------------------------------------------------

def aspp_forward(x_nchw, weight_oihw, gamma, beta, run_mean, run_var, *,
                 rate, eps=1e-5, store_dtype=jnp.bfloat16):
    B, Cin, H, W = map(int, x_nchw.shape)
    Cout, _, KH, KW = map(int, weight_oihw.shape)
    T = KH * KW
    pad = 0 if (KH == 1 and KW == 1) else rate

    cin_p = _round_up(Cin, 128)     # lane / MXU-K padding (no-op for real ASPP sizes)
    cout_p = _round_up(Cout, 128)   # lane-dense output stores
    budget, vmem_limit = _vmem_budget_and_limit()
    out_bytes = jnp.dtype(store_dtype).itemsize

    # ---- layout glue (module interface is NCHW; keep activations NHWC/bf16
    #      across surrounding layers to drop these passes end-to-end) ----
    x_nhwc = jnp.transpose(x_nchw, (0, 2, 3, 1)).astype(jnp.bfloat16)
    x_nhwc = jnp.pad(x_nhwc, ((0, 0), (0, 0), (0, 0), (0, cin_p - Cin)))

    # torch conv weight (Cout, Cin, KH, KW) -> (T, cin_p, cout_p), bf16 for MXU
    w = jnp.transpose(weight_oihw, (2, 3, 1, 0)).reshape(T, Cin, Cout)
    w = jnp.pad(w, ((0, 0), (0, cin_p - Cin), (0, cout_p - Cout))).astype(jnp.bfloat16)

    # fold eval-mode BatchNorm into a per-channel scale / bias (f32 epilogue)
    inv_std = 1.0 / jnp.sqrt(run_var + eps)
    scale = jnp.pad(gamma * inv_std, (0, cout_p - Cout)).reshape(1, cout_p)
    bias = jnp.pad(beta - run_mean * gamma * inv_std,
                   (0, cout_p - Cout)).reshape(1, cout_p)
    scale = scale.astype(jnp.float32)
    bias = bias.astype(jnp.float32)

    if T == 1:
        # ----------------- 1x1 conv path: flat auto-pipelined matmul ----------
        M = B * H * W
        tm = _choose_tm(M, cin_p, cout_p, budget, w_copies=2)
        M_pad = _round_up(M, tm)
        x_flat = x_nhwc.reshape(M, cin_p)
        x_flat = jnp.pad(x_flat, ((0, M_pad - M), (0, 0)))
        w2d = w[0]

        cost = pl.CostEstimate(
            flops=2 * M_pad * cin_p * cout_p,
            transcendentals=0,
            bytes_accessed=(M_pad * cin_p * 2 + cin_p * cout_p * 2
                            + M_pad * cout_p * out_bytes))

        def build_pw(single_buffer):
            return pl.pallas_call(
                _aspp_pointwise_kernel,
                out_shape=jax.ShapeDtypeStruct((M_pad, cout_p), store_dtype),
                grid_spec=pltpu.PrefetchScalarGridSpec(
                    num_scalar_prefetch=0,
                    grid=(M_pad // tm,),
                    in_specs=[
                        pl.BlockSpec((tm, cin_p), lambda i: (i, 0)),
                        _const_spec((cin_p, cout_p), lambda i: (0, 0), single_buffer),
                        _const_spec((1, cout_p), lambda i: (0, 0), single_buffer),
                        _const_spec((1, cout_p), lambda i: (0, 0), single_buffer),
                    ],
                    out_specs=pl.BlockSpec((tm, cout_p), lambda i: (i, 0))),
                compiler_params=pltpu.CompilerParams(
                    dimension_semantics=("parallel",),
                    vmem_limit_bytes=vmem_limit),
                cost_estimate=cost,
            )(x_flat, w2d, scale, bias)

        try:
            out_flat = build_pw(True)     # single-buffered constant operands
        except Exception:
            out_flat = build_pw(False)    # fallback: default double buffering

        out = out_flat[:M].reshape(B, H, W, cout_p)

    else:
        # ----------------- dilated 3x3 path: per-kh row-slab reuse ------------
        Wp = W + 2 * pad
        tile_h = _choose_tile_h(H, W, Wp, cin_p, cout_p, T, budget,
                                batch=B, w_copies=2)
        n_h = -(-H // tile_h)
        H_pad = n_h * tile_h
        # conv padding + extra bottom rows so every row-slab DMA stays in bounds
        x_p = jnp.pad(x_nhwc,
                      ((0, 0), (pad, pad + (H_pad - H)), (pad, pad), (0, 0)))

        kernel = functools.partial(
            _aspp_dilated_kernel, KH=KH, KW=KW, tile_h=tile_h, W=W,
            rate=rate, cin_p=cin_p)

        cost = pl.CostEstimate(
            flops=2 * B * H_pad * W * cin_p * cout_p * T,
            transcendentals=0,
            bytes_accessed=(KH * B * H_pad * Wp * cin_p * 2   # per-kh row slabs (KHx, not Tx)
                            + T * cin_p * cout_p * 2
                            + B * H_pad * W * cout_p * out_bytes))

        def build_dil(single_buffer):
            return pl.pallas_call(
                kernel,
                out_shape=jax.ShapeDtypeStruct((B, H_pad * W, cout_p), store_dtype),
                grid_spec=pltpu.PrefetchScalarGridSpec(
                    num_scalar_prefetch=0,
                    grid=(B, n_h),
                    in_specs=[
                        pl.BlockSpec(memory_space=pl.ANY),    # padded x stays in HBM
                        _const_spec((T, cin_p, cout_p),
                                    lambda b, hi: (0, 0, 0), single_buffer),
                        _const_spec((1, cout_p), lambda b, hi: (0, 0), single_buffer),
                        _const_spec((1, cout_p), lambda b, hi: (0, 0), single_buffer),
                    ],
                    out_specs=pl.BlockSpec((None, tile_h * W, cout_p),
                                           lambda b, hi: (b, hi, 0)),
                    scratch_shapes=[
                        pltpu.VMEM((2, tile_h, Wp, cin_p), jnp.bfloat16),  # kh slab, 2 slots
                        pltpu.SemaphoreType.DMA((2,)),
                        pltpu.VMEM((tile_h * W, cout_p), jnp.float32),     # f32 accumulator
                    ]),
                compiler_params=pltpu.CompilerParams(
                    dimension_semantics=("parallel", "parallel"),
                    vmem_limit_bytes=vmem_limit),
                cost_estimate=cost,
            )(x_p, w, scale, bias)

        try:
            out_flat = build_dil(True)
        except Exception:
            out_flat = build_dil(False)

        out = out_flat.reshape(B, H_pad, W, cout_p)[:, :H]

    out = out[..., :Cout]
    # Back to NCHW / caller dtype (the cast rides along with the transpose).
    return jnp.transpose(out, (0, 3, 1, 2)).astype(x_nchw.dtype)


# --------------------------------------------------------------------------
# Reference + test harness
# --------------------------------------------------------------------------

def aspp_reference(x, w, gamma, beta, mean, var, *, rate, eps=1e-5):
    KH = w.shape[2]
    pad = 0 if KH == 1 else rate
    y = jax.lax.conv_general_dilated(
        x, w, window_strides=(1, 1),
        padding=((pad, pad), (pad, pad)),
        rhs_dilation=(rate, rate),
        dimension_numbers=("NCHW", "OIHW", "NCHW"),
        precision=jax.lax.Precision.HIGHEST)
    inv_std = 1.0 / jnp.sqrt(var + eps)
    s = (gamma * inv_std).reshape(1, -1, 1, 1)
    b = (beta - mean * gamma * inv_std).reshape(1, -1, 1, 1)
    return jnp.maximum(y * s + b, 0.0)


def make_params(key, inplanes, planes, rate):
    kernel_size = 1 if rate == 1 else 3
    fan_in = inplanes * kernel_size * kernel_size
    std = math.sqrt(2.0 / fan_in)  # kaiming_normal_ (fan_in, relu)
    w = std * jax.random.normal(
        key, (planes, inplanes, kernel_size, kernel_size), dtype=jnp.float32)
    gamma = jnp.ones((planes,), jnp.float32)
    beta = jnp.zeros((planes,), jnp.float32)
    run_mean = jnp.zeros((planes,), jnp.float32)
    run_var = jnp.ones((planes,), jnp.float32)
    return w, gamma, beta, run_mean, run_var


if __name__ == "__main__":
    key = jax.random.PRNGKey(0)
    kx, kw1, kw2 = jax.random.split(key, 3)

    B, inplanes, planes, H, W = 2, 4, 8, 16, 16
    x = jax.random.normal(kx, (B, inplanes, H, W), dtype=jnp.float32)

    for rate, kw in ((1, kw1), (2, kw2)):  # 1x1 conv path and dilated 3x3 path
        w, gamma, beta, rm, rv = make_params(kw, inplanes, planes, rate)

        out = aspp_forward(x, w, gamma, beta, rm, rv, rate=rate)
        out = jax.block_until_ready(out)

        ref = aspp_reference(x, w, gamma, beta, rm, rv, rate=rate)
        ref = jax.block_until_ready(ref)

        assert out.shape == (B, planes, H, W), out.shape
        # bf16 MXU operands + bf16 store (f32 accumulation) vs an f32 HIGHEST
        # reference: expected ~1e-2-level deviation, hence the loose tolerance.
        if not np.allclose(np.asarray(out), np.asarray(ref), atol=5e-2, rtol=5e-2):
            raise AssertionError(f"mismatch vs reference for rate={rate}")

    print("KERNEL_OK")
</pallas_src>

<mosaic_0001>
module attributes {stable_mosaic.version = 11 : i64} {
  func.func @_aspp_pointwise_kernel(%arg0: i32, %arg1: memref<512x128xbf16, #tpu.memory_space<vmem>>, %arg2: memref<128x128xbf16, #tpu.memory_space<vmem>>, %arg3: memref<1x128xf32, #tpu.memory_space<vmem>>, %arg4: memref<1x128xf32, #tpu.memory_space<vmem>>, %arg5: memref<512x128xbf16, #tpu.memory_space<vmem>>) attributes {dimension_semantics = [#tpu.dimension_semantics<parallel>], iteration_bounds = array<i64: 1>, scalar_prefetch = 0 : i64, scratch_operands = 0 : i64, tpu.core_type = #tpu.core_type<tc>, window_params = [{transform_indices = @transform_0, window_bounds = array<i64: 512, 128>}, {pipeline_mode = #tpu.pipeline_mode<synchronous>, transform_indices = @transform_1, window_bounds = array<i64: 128, 128>}, {pipeline_mode = #tpu.pipeline_mode<synchronous>, transform_indices = @transform_2, window_bounds = array<i64: 1, 128>}, {pipeline_mode = #tpu.pipeline_mode<synchronous>, transform_indices = @transform_3, window_bounds = array<i64: 1, 128>}, {transform_indices = @transform_4, window_bounds = array<i64: 512, 128>}]} {
    %c0 = arith.constant 0 : index
    %c0_0 = arith.constant 0 : index
    %0 = vector.load %arg1[%c0, %c0_0] : memref<512x128xbf16, #tpu.memory_space<vmem>>, vector<512x128xbf16>
    %c0_1 = arith.constant 0 : index
    %c0_2 = arith.constant 0 : index
    %1 = vector.load %arg2[%c0_1, %c0_2] : memref<128x128xbf16, #tpu.memory_space<vmem>>, vector<128x128xbf16>
    %cst = arith.constant dense<0.000000e+00> : vector<512x128xf32>
    %2 = tpu.matmul %0, %1, %cst {dimension_numbers = #tpu.dot_dimension_numbers<[1], [0], [0], [1], [0, 0, 1, 1], [], []>} : vector<512x128xbf16>, vector<128x128xbf16>, vector<512x128xf32> -> vector<512x128xf32>
    %c0_3 = arith.constant 0 : index
    %c0_4 = arith.constant 0 : index
    %3 = vector.load %arg3[%c0_3, %c0_4] : memref<1x128xf32, #tpu.memory_space<vmem>>, vector<1x128xf32>
    %4 = vector.broadcast %3 : vector<1x128xf32> to vector<512x128xf32>
    %5 = arith.mulf %2, %4 : vector<512x128xf32>
    %c0_5 = arith.constant 0 : index
    %c0_6 = arith.constant 0 : index
    %6 = vector.load %arg4[%c0_5, %c0_6] : memref<1x128xf32, #tpu.memory_space<vmem>>, vector<1x128xf32>
    %7 = vector.broadcast %6 : vector<1x128xf32> to vector<512x128xf32>
    %8 = arith.addf %5, %7 : vector<512x128xf32>
    %cst_7 = arith.constant 0.000000e+00 : f32
    %9 = vector.broadcast %cst_7 : f32 to vector<512x128xf32>
    %10 = arith.maximumf %8, %9 : vector<512x128xf32>
    %11 = arith.truncf %10 : vector<512x128xf32> to vector<512x128xbf16>
    %c0_8 = arith.constant 0 : index
    %c0_9 = arith.constant 0 : index
    %12 = vector.load %arg5[%c0_8, %c0_9] : memref<512x128xbf16, #tpu.memory_space<vmem>>, vector<512x128xbf16>
    tpu.vector_store %arg5[%c0_8, %c0_9], %11 {strides = array<i32>} : memref<512x128xbf16, #tpu.memory_space<vmem>>, vector<512x128xbf16>,
    return
  }
  func.func @transform_0(%arg0: i32) -> (i32, i32) {
    %c0_i32 = arith.constant 0 : i32
    %c0_i32_0 = arith.constant 0 : i32
    return %arg0, %c0_i32 : i32, i32
  }
  func.func @transform_1(%arg0: i32) -> (i32, i32) {
    %c0_i32 = arith.constant 0 : i32
    %c0_i32_0 = arith.constant 0 : i32
    %c0_i32_1 = arith.constant 0 : i32
    return %c0_i32, %c0_i32_0 : i32, i32
  }
  func.func @transform_2(%arg0: i32) -> (i32, i32) {
    %c0_i32 = arith.constant 0 : i32
    %c0_i32_0 = arith.constant 0 : i32
    %c0_i32_1 = arith.constant 0 : i32
    return %c0_i32, %c0_i32_0 : i32, i32
  }
  func.func @transform_3(%arg0: i32) -> (i32, i32) {
    %c0_i32 = arith.constant 0 : i32
    %c0_i32_0 = arith.constant 0 : i32
    %c0_i32_1 = arith.constant 0 : i32
    return %c0_i32, %c0_i32_0 : i32, i32
  }
  func.func @transform_4(%arg0: i32) -> (i32, i32) {
    %c0_i32 = arith.constant 0 : i32
    %c0_i32_0 = arith.constant 0 : i32
    return %arg0, %c0_i32 : i32, i32
  }
}

module attributes {stable_mosaic.version = 11 : i64} {
  func.func @_aspp_pointwise_kernel(%arg0: i32, %arg1: memref<512x128xbf16, #tpu.memory_space<vmem>>, %arg2: memref<128x128xbf16, #tpu.memory_space<vmem>>, %arg3: memref<1x128xf32, #tpu.memory_space<vmem>>, %arg4: memref<1x128xf32, #tpu.memory_space<vmem>>, %arg5: memref<512x128xbf16, #tpu.memory_space<vmem>>) attributes {dimension_semantics = [#tpu.dimension_semantics<parallel>], iteration_bounds = array<i64: 1>, scalar_prefetch = 0 : i64, scratch_operands = 0 : i64, tpu.core_type = #tpu.core_type<tc>, window_params = [{transform_indices = @transform_0, window_bounds = array<i64: 512, 128>}, {pipeline_mode = #tpu.pipeline_mode<synchronous>, transform_indices = @transform_1, window_bounds = array<i64: 128, 128>}, {pipeline_mode = #tpu.pipeline_mode<synchronous>, transform_indices = @transform_2, window_bounds = array<i64: 1, 128>}, {pipeline_mode = #tpu.pipeline_mode<synchronous>, transform_indices = @transform_3, window_bounds = array<i64: 1, 128>}, {transform_indices = @transform_4, window_bounds = array<i64: 512, 128>}]} {
    %c0 = arith.constant 0 : index
    %c0_0 = arith.constant 0 : index
    %0 = vector.load %arg1[%c0, %c0_0] : memref<512x128xbf16, #tpu.memory_space<vmem>>, vector<512x128xbf16>
    %c0_1 = arith.constant 0 : index
    %c0_2 = arith.constant 0 : index
    %1 = vector.load %arg2[%c0_1, %c0_2] : memref<128x128xbf16, #tpu.memory_space<vmem>>, vector<128x128xbf16>
    %cst = arith.constant dense<0.000000e+00> : vector<512x128xf32>
    %2 = tpu.matmul %0, %1, %cst {dimension_numbers = #tpu.dot_dimension_numbers<[1], [0], [0], [1], [0, 0, 1, 1], [], []>} : vector<512x128xbf16>, vector<128x128xbf16>, vector<512x128xf32> -> vector<512x128xf32>
    %c0_3 = arith.constant 0 : index
    %c0_4 = arith.constant 0 : index
    %3 = vector.load %arg3[%c0_3, %c0_4] : memref<1x128xf32, #tpu.memory_space<vmem>>, vector<1x128xf32>
    %4 = vector.broadcast %3 : vector<1x128xf32> to vector<512x128xf32>
    %5 = arith.mulf %2, %4 : vector<512x128xf32>
    %c0_5 = arith.constant 0 : index
    %c0_6 = arith.constant 0 : index
    %6 = vector.load %arg4[%c0_5, %c0_6] : memref<1x128xf32, #tpu.memory_space<vmem>>, vector<1x128xf32>
    %7 = vector.broadcast %6 : vector<1x128xf32> to vector<512x128xf32>
    %8 = arith.addf %5, %7 : vector<512x128xf32>
    %cst_7 = arith.constant 0.000000e+00 : f32
    %9 = vector.broadcast %cst_7 : f32 to vector<512x128xf32>
    %10 = arith.maximumf %8, %9 : vector<512x128xf32>
    %11 = arith.truncf %10 : vector<512x128xf32> to vector<512x128xbf16>
    %c0_8 = arith.constant 0 : index
    %c0_9 = arith.constant 0 : index
    %12 = vector.load %arg5[%c0_8, %c0_9] : memref<512x128xbf16, #tpu.memory_space<vmem>>, vector<512x128xbf16>
    tpu.vector_store %arg5[%c0_8, %c0_9], %11 {strides = array<i32>} : memref<512x128xbf16, #tpu.memory_space<vmem>>, vector<512x128xbf16>,
    return
  }
  func.func @transform_0(%arg0: i32) -> (i32, i32) {
    %c0_i32 = arith.constant 0 : i32
    %c0_i32_0 = arith.constant 0 : i32
    return %arg0, %c0_i32 : i32, i32
  }
  func.func @transform_1(%arg0: i32) -> (i32, i32) {
    %c0_i32 = arith.constant 0 : i32
    %c0_i32_0 = arith.constant 0 : i32
    %c0_i32_1 = arith.constant 0 : i32
    return %c0_i32, %c0_i32_0 : i32, i32
  }
  func.func @transform_2(%arg0: i32) -> (i32, i32) {
    %c0_i32 = arith.constant 0 : i32
    %c0_i32_0 = arith.constant 0 : i32
    %c0_i32_1 = arith.constant 0 : i32
    return %c0_i32, %c0_i32_0 : i32, i32
  }
  func.func @transform_3(%arg0: i32) -> (i32, i32) {
    %c0_i32 = arith.constant 0 : i32
    %c0_i32_0 = arith.constant 0 : i32
    %c0_i32_1 = arith.constant 0 : i32
    return %c0_i32, %c0_i32_0 : i32, i32
  }
  func.func @transform_4(%arg0: i32) -> (i32, i32) {
    %c0_i32 = arith.constant 0 : i32
    %c0_i32_0 = arith.constant 0 : i32
    return %arg0, %c0_i32 : i32, i32
  }
}

</mosaic_0001>

<llo_original>
// kernel: tpu_custom_call.1
$region0: #{tpu_custom_call.1}
  #allocation0 [shape = 'u32[]', space=smem, size = 0x4, offset = 0x4, fixed_abs, tag = 'smem constant byte address 0x4 - core index']
  #allocation1 [shape = 'u32[144,128]{1,0:T(1,128)}', space=vmem, size = 0x12000, scoped, tag = 'internal scratch']
  %s0 = inlined_call_operand.hbm [shape: bf16[512,128], index: 0, kind: input, shape index: {}]
  %s1 = inlined_call_operand.hbm [shape: bf16[128,128], index: 1, kind: input, shape index: {}]
  %s2 = inlined_call_operand.vmem [shape: f32[1,128], index: 2, kind: input, shape index: {}]
  %s3 = inlined_call_operand.vmem [shape: f32[1,128], index: 3, kind: input, shape index: {}]
  %s4 = inlined_call_operand.hbm [shape: bf16[512,128], index: 4, kind: output, shape index: {}]
  %s5 = sld [smem:[#allocation0]]
  $region34: #{tpu_custom_call.1} parent=0
    _
  %s7 = ssub.s32 1, %s5
  %s8 = scalar_select 0, %s7, %s5
  $region1: #{tpu_custom_call.1} parent=0
    #allocation2 [shape = 'u8[131072]{0}', space=vmem, size = 0x20000, scoped, tag = 'input window, operand 0, single buffered']
    #allocation3 [shape = 's32[1]{0}', space=sflag, size = 0x4, scoped, tag = 'scoped memory for tpu_custom_call.1']
    #allocation4 [shape = 's32[1]{0}', space=sflag, size = 0x4, scoped, tag = 'scoped memory for tpu_custom_call.1']
    #allocation5 [shape = 'u8[32768]{0}', space=vmem, size = 0x8000, scoped, tag = 'input window, operand 1, single buffered']
    #allocation6 [shape = 's32[1]{0}', space=sflag, size = 0x4, scoped, tag = 'scoped memory for tpu_custom_call.1']
    #allocation7 [shape = 'u8[131072]{0}', space=vmem, size = 0x20000, scoped, tag = 'output window, operand 0, single buffered']
    %9 = vsyncpa [#allocation3], 0
    %10 = vsyncpa [#allocation6], 0
    %11 = vsyncpa [#allocation4], 0
    // Predicated region
    $region2: #{tpu_custom_call.1} parent=1 // pred_check
      _
    $region3: #{tpu_custom_call.1} parent=1 // pred_check_branch
      %13 = sbr.rel (0) target = $region5
    $region4: #{tpu_custom_call.1} parent=1 // pred_region
      %s15 = ssub.s32 4096, 4096
      %16 = vsyncadd [#allocation3], %s15
      %s17 = sshll.u32 [#allocation2], 4
      %s18 = int_to_ptr.vmem [resolvable:$true] %s17
      %23 = dma.hbm_to_vmem [thread:$0]  %s0, 4096, %s18, [#allocation3], 64, 64, 4
    $region5: #{tpu_custom_call.1} parent=1 // pred_fallthru
      _
    // Predicated region
    $region6: #{tpu_custom_call.1} parent=1 // pred_check
      _
    $region7: #{tpu_custom_call.1} parent=1 // pred_check_branch
      %25 = sbr.rel (0) target = $region9
    $region8: #{tpu_custom_call.1} parent=1 // pred_region
      %s27 = ssub.s32 1024, 1024
      %28 = vsyncadd [#allocation6], %s27
      %s29 = sshll.u32 [#allocation5], 4
      %s30 = int_to_ptr.vmem [resolvable:$true] %s29
      %35 = dma.hbm_to_vmem [thread:$0]  %s1, 1024, %s30, [#allocation6], 64, 64, 4
    $region9: #{tpu_custom_call.1} parent=1 // pred_fallthru
      _
    // Predicated region
    $region10: #{tpu_custom_call.1} parent=1 // pred_check
      _
    $region11: #{tpu_custom_call.1} parent=1 // pred_check_branch
      %37 = sbr.rel (0) target = $region13
    $region12: #{tpu_custom_call.1} parent=1 // pred_region
      _
    $region13: #{tpu_custom_call.1} parent=1 // pred_fallthru
      _
    // Predicated region
    $region14: #{tpu_custom_call.1} parent=1 // pred_check
      _
    $region15: #{tpu_custom_call.1} parent=1 // pred_check_branch
      %39 = sbr.rel (0) target = $region17
    $region16: #{tpu_custom_call.1} parent=1 // pred_region
      _
    $region17: #{tpu_custom_call.1} parent=1 // pred_fallthru
      _
    // Predicated region
    $region18: #{tpu_custom_call.1} parent=1 // pred_check
      _
    $region19: #{tpu_custom_call.1} parent=1 // pred_check_branch
      %41 = sbr.rel (0) target = $region21
    $region20: #{tpu_custom_call.1} parent=1 // pred_region
      %42 = dma.done [#allocation3], 4096
    $region21: #{tpu_custom_call.1} parent=1 // pred_fallthru
      _
    // Predicated region
    $region22: #{tpu_custom_call.1} parent=1 // pred_check
      _
    $region23: #{tpu_custom_call.1} parent=1 // pred_check_branch
      %44 = sbr.rel (0) target = $region25
    $region24: #{tpu_custom_call.1} parent=1 // pred_region
      %45 = dma.done [#allocation6], 1024
    $region25: #{tpu_custom_call.1} parent=1 // pred_fallthru
      _
    %v47 = vld [vmem:[#allocation2] sm:$0xf]
    %v48 = vld [vmem:[#allocation2 + $0x4] sm:$0xf]
    %v49 = vld [vmem:[#allocation2 + $0x8] sm:$0xf]
    %v50 = vld [vmem:[#allocation2 + $0xc] sm:$0xf]
    %v51 = vld [vmem:[#allocation2 + $0x10] sm:$0xf]
    %v52 = vld [vmem:[#allocation2 + $0x14] sm:$0xf]
    %v53 = vld [vmem:[#allocation2 + $0x18] sm:$0xf]
    %v54 = vld [vmem:[#allocation2 + $0x1c] sm:$0xf]
    %v55 = vld [vmem:[#allocation2 + $0x20] sm:$0xf]
    %v56 = vld [vmem:[#allocation2 + $0x24] sm:$0xf]
    %v57 = vld [vmem:[#allocation2 + $0x28] sm:$0xf]
    %v58 = vld [vmem:[#allocation2 + $0x2c] sm:$0xf]
    %v59 = vld [vmem:[#allocation2 + $0x30] sm:$0xf]
    %v60 = vld [vmem:[#allocation2 + $0x34] sm:$0xf]
    %v61 = vld [vmem:[#allocation2 + $0x38] sm:$0xf]
    %v62 = vld [vmem:[#allocation2 + $0x3c] sm:$0xf]
    %v63 = vld [vmem:[#allocation2 + $0x40] sm:$0xf]
    %v64 = vld [vmem:[#allocation2 + $0x44] sm:$0xf]
    %v65 = vld [vmem:[#allocation2 + $0x48] sm:$0xf]
    %v66 = vld [vmem:[#allocation2 + $0x4c] sm:$0xf]
    %v67 = vld [vmem:[#allocation2 + $0x50] sm:$0xf]
    %v68 = vld [vmem:[#allocation2 + $0x54] sm:$0xf]
    %v69 = vld [vmem:[#allocation2 + $0x58] sm:$0xf]
    %v70 = vld [vmem:[#allocation2 + $0x5c] sm:$0xf]
    %v71 = vld [vmem:[#allocation2 + $0x60] sm:$0xf]
    %v72 = vld [vmem:[#allocation2 + $0x64] sm:$0xf]
    %v73 = vld [vmem:[#allocation2 + $0x68] sm:$0xf]
    %v74 = vld [vmem:[#allocation2 + $0x6c] sm:$0xf]
    %v75 = vld [vmem:[#allocation2 + $0x70] sm:$0xf]
    %v76 = vld [vmem:[#allocation2 + $0x74] sm:$0xf]
    %v77 = vld [vmem:[#allocation2 + $0x78] sm:$0xf]
    %v78 = vld [vmem:[#allocation2 + $0x7c] sm:$0xf]
    %v79 = vld [vmem:[#allocation2 + $0x80] sm:$0xf]
    %v80 = vld [vmem:[#allocation2 + $0x84] sm:$0xf]
    %v81 = vld [vmem:[#allocation2 + $0x88] sm:$0xf]
    %v82 = vld [vmem:[#allocation2 + $0x8c] sm:$0xf]
    %v83 = vld [vmem:[#allocation2 + $0x90] sm:$0xf]
    %v84 = vld [vmem:[#allocation2 + $0x94] sm:$0xf]
    %v85 = vld [vmem:[#allocation2 + $0x98] sm:$0xf]
    %v86 = vld [vmem:[#allocation2 + $0x9c] sm:$0xf]
    %v87 = vld [vmem:[#allocation2 + $0xa0] sm:$0xf]
    %v88 = vld [vmem:[#allocation2 + $0xa4] sm:$0xf]
    %v89 = vld [vmem:[#allocation2 + $0xa8] sm:$0xf]
    %v90 = vld [vmem:[#allocation2 + $0xac] sm:$0xf]
    %v91 = vld [vmem:[#allocation2 + $0xb0] sm:$0xf]
    %v92 = vld [vmem:[#allocation2 + $0xb4] sm:$0xf]
    %v93 = vld [vmem:[#allocation2 + $0xb8] sm:$0xf]
    %v94 = vld [vmem:[#allocation2 + $0xbc] sm:$0xf]
    %v95 = vld [vmem:[#allocation2 + $0xc0] sm:$0xf]
    %v96 = vld [vmem:[#allocation2 + $0xc4] sm:$0xf]
    %v97 = vld [vmem:[#allocation2 + $0xc8] sm:$0xf]
    %v98 = vld [vmem:[#allocation2 + $0xcc] sm:$0xf]
    %v99 = vld [vmem:[#allocation2 + $0xd0] sm:$0xf]
    %v100 = vld [vmem:[#allocation2 + $0xd4] sm:$0xf]
    %v101 = vld [vmem:[#allocation2 + $0xd8] sm:$0xf]
    %v102 = vld [vmem:[#allocation2 + $0xdc] sm:$0xf]
    %v103 = vld [vmem:[#allocation2 + $0xe0] sm:$0xf]
    %v104 = vld [vmem:[#allocation2 + $0xe4] sm:$0xf]
    %v105 = vld [vmem:[#allocation2 + $0xe8] sm:$0xf]
    %v106 = vld [vmem:[#allocation2 + $0xec] sm:$0xf]
    %v107 = vld [vmem:[#allocation2 + $0xf0] sm:$0xf]
    %v108 = vld [vmem:[#allocation2 + $0xf4] sm:$0xf]
    %v109 = vld [vmem:[#allocation2 + $0xf8] sm:$0xf]
    %v110 = vld [vmem:[#allocation2 + $0xfc] sm:$0xf]
    %v111 = vld [vmem:[#allocation5] sm:$0xf]
    %v112 = vld [vmem:[#allocation5 + $0x4] sm:$0xf]
    %v113 = vld [vmem:[#allocation5 + $0x8] sm:$0xf]
    %v114 = vld [vmem:[#allocation5 + $0xc] sm:$0xf]
    %v115 = vld [vmem:[#allocation5 + $0x10] sm:$0xf]
    %v116 = vld [vmem:[#allocation5 + $0x14] sm:$0xf]
    %v117 = vld [vmem:[#allocation5 + $0x18] sm:$0xf]
    %v118 = vld [vmem:[#allocation5 + $0x1c] sm:$0xf]
    %v119 = vld [vmem:[#allocation5 + $0x20] sm:$0xf]
    %v120 = vld [vmem:[#allocation5 + $0x24] sm:$0xf]
    %v121 = vld [vmem:[#allocation5 + $0x28] sm:$0xf]
    %v122 = vld [vmem:[#allocation5 + $0x2c] sm:$0xf]
    %v123 = vld [vmem:[#allocation5 + $0x30] sm:$0xf]
    %v124 = vld [vmem:[#allocation5 + $0x34] sm:$0xf]
    %v125 = vld [vmem:[#allocation5 + $0x38] sm:$0xf]
    %v126 = vld [vmem:[#allocation5 + $0x3c] sm:$0xf]
    %v191 = vunpack.c.l.b16 %v47
    %v192 = vunpack.c.l.b16 %v48
    %v193 = vunpack.c.l.b16 %v49
    %v194 = vunpack.c.l.b16 %v50
    %v195 = vunpack.c.l.b16 %v51
    %v196 = vunpack.c.l.b16 %v52
    %v197 = vunpack.c.l.b16 %v53
    %v198 = vunpack.c.l.b16 %v54
    %v199 = vunpack.c.l.b16 %v55
    %v200 = vunpack.c.l.b16 %v56
    %v201 = vunpack.c.l.b16 %v57
    %v202 = vunpack.c.l.b16 %v58
    %v203 = vunpack.c.l.b16 %v59
    %v204 = vunpack.c.l.b16 %v60
    %v205 = vunpack.c.l.b16 %v61
    %v206 = vunpack.c.l.b16 %v62
    %v207 = vunpack.c.l.b16 %v63
    %v208 = vunpack.c.l.b16 %v64
    %v209 = vunpack.c.l.b16 %v65
    %v210 = vunpack.c.l.b16 %v66
    %v211 = vunpack.c.l.b16 %v67
    %v212 = vunpack.c.l.b16 %v68
    %v213 = vunpack.c.l.b16 %v69
    %v214 = vunpack.c.l.b16 %v70
    %v215 = vunpack.c.l.b16 %v71
    %v216 = vunpack.c.l.b16 %v72
    %v217 = vunpack.c.l.b16 %v73
    %v218 = vunpack.c.l.b16 %v74
    %v219 = vunpack.c.l.b16 %v75
    %v220 = vunpack.c.l.b16 %v76
    %v221 = vunpack.c.l.b16 %v77
    %v222 = vunpack.c.l.b16 %v78
    %v223 = vunpack.c.l.b16 %v79
    %v224 = vunpack.c.l.b16 %v80
    %v225 = vunpack.c.l.b16 %v81
    %v226 = vunpack.c.l.b16 %v82
    %v227 = vunpack.c.l.b16 %v83
    %v228 = vunpack.c.l.b16 %v84
    %v229 = vunpack.c.l.b16 %v85
    %v230 = vunpack.c.l.b16 %v86
    %v231 = vunpack.c.l.b16 %v87
    %v232 = vunpack.c.l.b16 %v88
    %v233 = vunpack.c.l.b16 %v89
    %v234 = vunpack.c.l.b16 %v90
    %v235 = vunpack.c.l.b16 %v91
    %v236 = vunpack.c.l.b16 %v92
    %v237 = vunpack.c.l.b16 %v93
    %v238 = vunpack.c.l.b16 %v94
    %v239 = vunpack.c.l.b16 %v95
    %v240 = vunpack.c.l.b16 %v96
    %v241 = vunpack.c.l.b16 %v97
    %v242 = vunpack.c.l.b16 %v98
    %v243 = vunpack.c.l.b16 %v99
    %v244 = vunpack.c.l.b16 %v100
    %v245 = vunpack.c.l.b16 %v101
    %v246 = vunpack.c.l.b16 %v102
    %v247 = vunpack.c.l.b16 %v103
    %v248 = vunpack.c.l.b16 %v104
    %v249 = vunpack.c.l.b16 %v105
    %v250 = vunpack.c.l.b16 %v106
    %v251 = vunpack.c.l.b16 %v107
    %v252 = vunpack.c.l.b16 %v108
    %v253 = vunpack.c.l.b16 %v109
    %v254 = vunpack.c.l.b16 %v110
    %v255 = vpack.c.b16 %v192, %v191
    %v256 = vpack.c.b16 %v194, %v193
    %v257 = vpack.c.b16 %v196, %v195
    %v258 = vpack.c.b16 %v198, %v197
    %v259 = vpack.c.b16 %v200, %v199
    %v260 = vpack.c.b16 %v202, %v201
    %v261 = vpack.c.b16 %v204, %v203
    %v262 = vpack.c.b16 %v206, %v205
    %v263 = vpack.c.b16 %v208, %v207
    %v264 = vpack.c.b16 %v210, %v209
    %v265 = vpack.c.b16 %v212, %v211
    %v266 = vpack.c.b16 %v214, %v213
    %v267 = vpack.c.b16 %v216, %v215
    %v268 = vpack.c.b16 %v218, %v217
    %v269 = vpack.c.b16 %v220, %v219
    %v270 = vpack.c.b16 %v222, %v221
    %v271 = vpack.c.b16 %v224, %v223
    %v272 = vpack.c.b16 %v226, %v225
    %v273 = vpack.c.b16 %v228, %v227
    %v274 = vpack.c.b16 %v230, %v229
    %v275 = vpack.c.b16 %v232, %v231
    %v276 = vpack.c.b16 %v234, %v233
    %v277 = vpack.c.b16 %v236, %v235
    %v278 = vpack.c.b16 %v238, %v237
    %v279 = vpack.c.b16 %v240, %v239
    %v280 = vpack.c.b16 %v242, %v241
    %v281 = vpack.c.b16 %v244, %v243
    %v282 = vpack.c.b16 %v246, %v245
    %v283 = vpack.c.b16 %v248, %v247
    %v284 = vpack.c.b16 %v250, %v249
    %v285 = vpack.c.b16 %v252, %v251
    %v286 = vpack.c.b16 %v254, %v253
    %v335 = vunpack.c.l.b16 %v111
    %v336 = vunpack.c.l.b16 %v112
    %v337 = vunpack.c.l.b16 %v113
    %v338 = vunpack.c.l.b16 %v114
    %v339 = vunpack.c.l.b16 %v115
    %v340 = vunpack.c.l.b16 %v116
    %v341 = vunpack.c.l.b16 %v117
    %v342 = vunpack.c.l.b16 %v118
    %v343 = vunpack.c.l.b16 %v119
    %v344 = vunpack.c.l.b16 %v120
    %v345 = vunpack.c.l.b16 %v121
    %v346 = vunpack.c.l.b16 %v122
    %v347 = vunpack.c.l.b16 %v123
    %v348 = vunpack.c.l.b16 %v124
    %v349 = vunpack.c.l.b16 %v125
    %v350 = vunpack.c.l.b16 %v126
    %v351 = vpack.c.b16 %v336, %v335
    %v352 = vpack.c.b16 %v338, %v337
    %v353 = vpack.c.b16 %v340, %v339
    %v354 = vpack.c.b16 %v342, %v341
    %v355 = vpack.c.b16 %v344, %v343
    %v356 = vpack.c.b16 %v346, %v345
    %v357 = vpack.c.b16 %v348, %v347
    %v358 = vpack.c.b16 %v350, %v349
    %367 = vmatprep.subr.bf16.mxu0 0
    %368 = vmatpush1.bf16.msra.mxu0 %v358
    %369 = vmatprep.subr.bf16.mxu0 0
    %370 = vmatpush1.bf16.msra.mxu0 %v357
    %371 = vmatprep.subr.bf16.mxu0 0
    %372 = vmatpush1.bf16.msra.mxu0 %v356
    %373 = vmatprep.subr.bf16.mxu0 0
    %374 = vmatpush1.bf16.msra.mxu0 %v355
    %375 = vmatprep.subr.bf16.mxu0 0
    %376 = vmatpush1.bf16.msra.mxu0 %v354
    %377 = vmatprep.subr.bf16.mxu0 0
    %378 = vmatpush1.bf16.msra.mxu0 %v353
    %379 = vmatprep.subr.bf16.mxu0 0
    %380 = vmatpush1.bf16.msra.mxu0 %v352
    %381 = vmatprep.subr.bf16.mxu0 0
    %382 = vmatpush1.bf16.msra.mxu0 %v351
    %383 = vmatprep.subr.bf16.mxu0 0
    %384 = vmatpush2.bf16.msra.mxu0 0
    %385 = vmatprep.subr.bf16.mxu0 0
    %386 = vmatpush2.bf16.msra.mxu0 0
    %387 = vmatprep.subr.bf16.mxu0 0
    %388 = vmatpush2.bf16.msra.mxu0 0
    %389 = vmatprep.subr.bf16.mxu0 0
    %390 = vmatpush2.bf16.msra.mxu0 0
    %391 = vmatprep.subr.bf16.mxu0 0
    %392 = vmatpush2.bf16.msra.mxu0 0
    %393 = vmatprep.subr.bf16.mxu0 0
    %394 = vmatpush2.bf16.msra.mxu0 0
    %395 = vmatprep.subr.bf16.mxu0 0
    %396 = vmatpush2.bf16.msra.mxu0 0
    %397 = vmatprep.subr.bf16.mxu0 0
    %398 = vmatpush2.bf16.msra.mxu0 0
    %399 = vmatprep.mubr.bf16.mxu0 0
    %400 = vmatmul.mubr.bf16.gmra.mxu0 %v255
    %v401 = vpop.f32.mrf.mxu0
    %v402 = vadd.f32 0.0, %v401
    %v403 = vpop.f32.mrf.mxu0
    %v404 = vpop.f32.mrf.mxu0
    %v405 = vadd.f32 0.0, %v404
    %v406 = vpop.f32.mrf.mxu0
    %407 = vmatprep.mubr.bf16.mxu0 0
    %408 = vmatmul.mubr.bf16.gmra.mxu0 %v256
    %v409 = vpop.f32.mrf.mxu0
    %v410 = vadd.f32 0.0, %v409
    %v411 = vpop.f32.mrf.mxu0
    %v412 = vpop.f32.mrf.mxu0
    %v413 = vadd.f32 0.0, %v412
    %v414 = vpop.f32.mrf.mxu0
    %415 = vmatprep.mubr.bf16.mxu0 0
    %416 = vmatmul.mubr.bf16.gmra.mxu0 %v257
    %v417 = vpop.f32.mrf.mxu0
    %v418 = vadd.f32 0.0, %v417
    %v419 = vpop.f32.mrf.mxu0
    %v420 = vpop.f32.mrf.mxu0
    %v421 = vadd.f32 0.0, %v420
    %v422 = vpop.f32.mrf.mxu0
    %423 = vmatprep.mubr.bf16.mxu0 0
    %424 = vmatmul.mubr.bf16.gmra.mxu0 %v258
    %v425 = vpop.f32.mrf.mxu0
    %v426 = vadd.f32 0.0, %v425
    %v427 = vpop.f32.mrf.mxu0
    %v428 = vpop.f32.mrf.mxu0
    %v429 = vadd.f32 0.0, %v428
    %v430 = vpop.f32.mrf.mxu0
    %431 = vmatprep.mubr.bf16.mxu0 0
    %432 = vmatmul.mubr.bf16.gmra.mxu0 %v259
    %v433 = vpop.f32.mrf.mxu0
    %v434 = vadd.f32 0.0, %v433
    %v435 = vpop.f32.mrf.mxu0
    %v436 = vpop.f32.mrf.mxu0
    %v437 = vadd.f32 0.0, %v436
    %v438 = vpop.f32.mrf.mxu0
    %439 = vmatprep.mubr.bf16.mxu0 0
    %440 = vmatmul.mubr.bf16.gmra.mxu0 %v260
    %v441 = vpop.f32.mrf.mxu0
    %v442 = vadd.f32 0.0, %v441
    %v443 = vpop.f32.mrf.mxu0
    %v444 = vpop.f32.mrf.mxu0
    %v445 = vadd.f32 0.0, %v444
    %v446 = vpop.f32.mrf.mxu0
    %447 = vmatprep.mubr.bf16.mxu0 0
    %448 = vmatmul.mubr.bf16.gmra.mxu0 %v261
    %v449 = vpop.f32.mrf.mxu0
    %v450 = vadd.f32 0.0, %v449
    %v451 = vpop.f32.mrf.mxu0
    %v452 = vpop.f32.mrf.mxu0
    %v453 = vadd.f32 0.0, %v452
    %v454 = vpop.f32.mrf.mxu0
    %455 = vmatprep.mubr.bf16.mxu0 0
    %456 = vmatmul.mubr.bf16.gmra.mxu0 %v262
    %v457 = vpop.f32.mrf.mxu0
    %v458 = vadd.f32 0.0, %v457
    %v459 = vpop.f32.mrf.mxu0
    %v460 = vpop.f32.mrf.mxu0
    %v461 = vadd.f32 0.0, %v460
    %v462 = vpop.f32.mrf.mxu0
    %463 = vmatprep.mubr.bf16.mxu0 0
    %464 = vmatmul.mubr.bf16.gmra.mxu0 %v263
    %v465 = vpop.f32.mrf.mxu0
    %v466 = vadd.f32 0.0, %v465
    %v467 = vpop.f32.mrf.mxu0
    %v468 = vpop.f32.mrf.mxu0
    %v469 = vadd.f32 0.0, %v468
    %v470 = vpop.f32.mrf.mxu0
    %471 = vmatprep.mubr.bf16.mxu0 0
    %472 = vmatmul.mubr.bf16.gmra.mxu0 %v264
    %v473 = vpop.f32.mrf.mxu0
    %v474 = vadd.f32 0.0, %v473
    %v475 = vpop.f32.mrf.mxu0
    %v476 = vpop.f32.mrf.mxu0
    %v477 = vadd.f32 0.0, %v476
    %v478 = vpop.f32.mrf.mxu0
    %479 = vmatprep.mubr.bf16.mxu0 0
    %480 = vmatmul.mubr.bf16.gmra.mxu0 %v265
    %v481 = vpop.f32.mrf.mxu0
    %v482 = vadd.f32 0.0, %v481
    %v483 = vpop.f32.mrf.mxu0
    %v484 = vpop.f32.mrf.mxu0
    %v485 = vadd.f32 0.0, %v484
    %v486 = vpop.f32.mrf.mxu0
    %487 = vmatprep.mubr.bf16.mxu0 0
    %488 = vmatmul.mubr.bf16.gmra.mxu0 %v266
    %v489 = vpop.f32.mrf.mxu0
    %v490 = vadd.f32 0.0, %v489
    %v491 = vpop.f32.mrf.mxu0
    %v492 = vpop.f32.mrf.mxu0
    %v493 = vadd.f32 0.0, %v492
    %v494 = vpop.f32.mrf.mxu0
    %495 = vmatprep.mubr.bf16.mxu0 0
    %496 = vmatmul.mubr.bf16.gmra.mxu0 %v267
    %v497 = vpop.f32.mrf.mxu0
    %v498 = vadd.f32 0.0, %v497
    %v499 = vpop.f32.mrf.mxu0
    %v500 = vpop.f32.mrf.mxu0
    %v501 = vadd.f32 0.0, %v500
    %v502 = vpop.f32.mrf.mxu0
    %503 = vmatprep.mubr.bf16.mxu0 0
    %504 = vmatmul.mubr.bf16.gmra.mxu0 %v268
    %v505 = vpop.f32.mrf.mxu0
    %v506 = vadd.f32 0.0, %v505
    %v507 = vpop.f32.mrf.mxu0
    %v508 = vpop.f32.mrf.mxu0
    %v509 = vadd.f32 0.0, %v508
    %v510 = vpop.f32.mrf.mxu0
    %511 = vmatprep.mubr.bf16.mxu0 0
    %512 = vmatmul.mubr.bf16.gmra.mxu0 %v269
    %v513 = vpop.f32.mrf.mxu0
    %v514 = vadd.f32 0.0, %v513
    %v515 = vpop.f32.mrf.mxu0
    %v516 = vpop.f32.mrf.mxu0
    %v517 = vadd.f32 0.0, %v516
    %v518 = vpop.f32.mrf.mxu0
    %519 = vmatprep.mubr.bf16.mxu0 0
    %520 = vmatmul.mubr.bf16.gmra.mxu0 %v270
    %v521 = vpop.f32.mrf.mxu0
    %v522 = vadd.f32 0.0, %v521
    %v523 = vpop.f32.mrf.mxu0
    %v524 = vpop.f32.mrf.mxu0
    %v525 = vadd.f32 0.0, %v524
    %v526 = vpop.f32.mrf.mxu0
    %527 = vmatprep.mubr.bf16.mxu0 0
    %528 = vmatmul.mubr.bf16.gmra.mxu0 %v271
    %v529 = vpop.f32.mrf.mxu0
    %v530 = vadd.f32 0.0, %v529
    %v531 = vpop.f32.mrf.mxu0
    %v532 = vpop.f32.mrf.mxu0
    %v533 = vadd.f32 0.0, %v532
    %v534 = vpop.f32.mrf.mxu0
    %535 = vmatprep.mubr.bf16.mxu0 0
    %536 = vmatmul.mubr.bf16.gmra.mxu0 %v272
    %v537 = vpop.f32.mrf.mxu0
    %v538 = vadd.f32 0.0, %v537
    %v539 = vpop.f32.mrf.mxu0
    %v540 = vpop.f32.mrf.mxu0
    %v541 = vadd.f32 0.0, %v540
    %v542 = vpop.f32.mrf.mxu0
    %543 = vmatprep.mubr.bf16.mxu0 0
    %544 = vmatmul.mubr.bf16.gmra.mxu0 %v273
    %v545 = vpop.f32.mrf.mxu0
    %v546 = vadd.f32 0.0, %v545
    %v547 = vpop.f32.mrf.mxu0
    %v548 = vpop.f32.mrf.mxu0
    %v549 = vadd.f32 0.0, %v548
    %v550 = vpop.f32.mrf.mxu0
    %551 = vmatprep.mubr.bf16.mxu0 0
    %552 = vmatmul.mubr.bf16.gmra.mxu0 %v274
    %v553 = vpop.f32.mrf.mxu0
    %v554 = vadd.f32 0.0, %v553
    %v555 = vpop.f32.mrf.mxu0
    %v556 = vpop.f32.mrf.mxu0
    %v557 = vadd.f32 0.0, %v556
    %v558 = vpop.f32.mrf.mxu0
    %559 = vmatprep.mubr.bf16.mxu0 0
    %560 = vmatmul.mubr.bf16.gmra.mxu0 %v275
    %v561 = vpop.f32.mrf.mxu0
    %v562 = vadd.f32 0.0, %v561
    %v563 = vpop.f32.mrf.mxu0
    %v564 = vpop.f32.mrf.mxu0
    %v565 = vadd.f32 0.0, %v564
    %v566 = vpop.f32.mrf.mxu0
    %567 = vmatprep.mubr.bf16.mxu0 0
    %568 = vmatmul.mubr.bf16.gmra.mxu0 %v276
    %v569 = vpop.f32.mrf.mxu0
    %v570 = vadd.f32 0.0, %v569
    %v571 = vpop.f32.mrf.mxu0
    %v572 = vpop.f32.mrf.mxu0
    %v573 = vadd.f32 0.0, %v572
    %v574 = vpop.f32.mrf.mxu0
    %575 = vmatprep.mubr.bf16.mxu0 0
    %576 = vmatmul.mubr.bf16.gmra.mxu0 %v277
    %v577 = vpop.f32.mrf.mxu0
    %v578 = vadd.f32 0.0, %v577
    %v579 = vpop.f32.mrf.mxu0
    %v580 = vpop.f32.mrf.mxu0
    %v581 = vadd.f32 0.0, %v580
    %v582 = vpop.f32.mrf.mxu0
    %583 = vmatprep.mubr.bf16.mxu0 0
    %584 = vmatmul.mubr.bf16.gmra.mxu0 %v278
    %v585 = vpop.f32.mrf.mxu0
    %v586 = vadd.f32 0.0, %v585
    %v587 = vpop.f32.mrf.mxu0
    %v588 = vpop.f32.mrf.mxu0
    %v589 = vadd.f32 0.0, %v588
    %v590 = vpop.f32.mrf.mxu0
    %591 = vmatprep.mubr.bf16.mxu0 0
    %592 = vmatmul.mubr.bf16.gmra.mxu0 %v279
    %v593 = vpop.f32.mrf.mxu0
    %v594 = vadd.f32 0.0, %v593
    %v595 = vpop.f32.mrf.mxu0
    %v596 = vpop.f32.mrf.mxu0
    %v597 = vadd.f32 0.0, %v596
    %v598 = vpop.f32.mrf.mxu0
    %599 = vmatprep.mubr.bf16.mxu0 0
    %600 = vmatmul.mubr.bf16.gmra.mxu0 %v280
    %v601 = vpop.f32.mrf.mxu0
    %v602 = vadd.f32 0.0, %v601
    %v603 = vpop.f32.mrf.mxu0
    %v604 = vpop.f32.mrf.mxu0
    %v605 = vadd.f32 0.0, %v604
    %v606 = vpop.f32.mrf.mxu0
    %607 = vmatprep.mubr.bf16.mxu0 0
    %608 = vmatmul.mubr.bf16.gmra.mxu0 %v281
    %v609 = vpop.f32.mrf.mxu0
    %v610 = vadd.f32 0.0, %v609
    %v611 = vpop.f32.mrf.mxu0
    %v612 = vpop.f32.mrf.mxu0
    %v613 = vadd.f32 0.0, %v612
    %v614 = vpop.f32.mrf.mxu0
    %615 = vmatprep.mubr.bf16.mxu0 0
    %616 = vmatmul.mubr.bf16.gmra.mxu0 %v282
    %v617 = vpop.f32.mrf.mxu0
    %v618 = vadd.f32 0.0, %v617
    %v619 = vpop.f32.mrf.mxu0
    %v620 = vpop.f32.mrf.mxu0
    %v621 = vadd.f32 0.0, %v620
    %v622 = vpop.f32.mrf.mxu0
    %623 = vmatprep.mubr.bf16.mxu0 0
    %624 = vmatmul.mubr.bf16.gmra.mxu0 %v283
    %v625 = vpop.f32.mrf.mxu0
    %v626 = vadd.f32 0.0, %v625
    %v627 = vpop.f32.mrf.mxu0
    %v628 = vpop.f32.mrf.mxu0
    %v629 = vadd.f32 0.0, %v628
    %v630 = vpop.f32.mrf.mxu0
    %631 = vmatprep.mubr.bf16.mxu0 0
    %632 = vmatmul.mubr.bf16.gmra.mxu0 %v284
    %v633 = vpop.f32.mrf.mxu0
    %v634 = vadd.f32 0.0, %v633
    %v635 = vpop.f32.mrf.mxu0
    %v636 = vpop.f32.mrf.mxu0
    %v637 = vadd.f32 0.0, %v636
    %v638 = vpop.f32.mrf.mxu0
    %639 = vmatprep.mubr.bf16.mxu0 0
    %640 = vmatmul.mubr.bf16.gmra.mxu0 %v285
    %v641 = vpop.f32.mrf.mxu0
    %v642 = vadd.f32 0.0, %v641
    %v643 = vpop.f32.mrf.mxu0
    %v644 = vpop.f32.mrf.mxu0
    %v645 = vadd.f32 0.0, %v644
    %v646 = vpop.f32.mrf.mxu0
    %647 = vmatprep.mubr.bf16.mxu0 0
    %648 = vmatmul.mubr.bf16.gmra.mxu0 %v286
    %v649 = vpop.f32.mrf.mxu0
    %v650 = vadd.f32 0.0, %v649
    %v651 = vpop.f32.mrf.mxu0
    %v652 = vpop.f32.mrf.mxu0
    %v653 = vadd.f32 0.0, %v652
    %v654 = vpop.f32.mrf.mxu0
    %655 = vdwg.mxu0
    %v656 = vld [vmem:[%s2] sm:$0x1]
    %v658 = vlaneseq
    %v659 = vshrl.u32 %v658, 7
    %v660 = vsub.s32 0, %v659
    %v661 = vrot.slane %v656, %v660
    %v663 = vmul.f32 %v402, %v661
    %v664 = vmul.f32 %v405, %v661
    %v665 = vmul.f32 %v410, %v661
    %v666 = vmul.f32 %v413, %v661
    %v667 = vmul.f32 %v418, %v661
    %v668 = vmul.f32 %v421, %v661
    %v669 = vmul.f32 %v426, %v661
    %v670 = vmul.f32 %v429, %v661
    %v671 = vmul.f32 %v434, %v661
    %v672 = vmul.f32 %v437, %v661
    %v673 = vmul.f32 %v442, %v661
    %v674 = vmul.f32 %v445, %v661
    %v675 = vmul.f32 %v450, %v661
    %v676 = vmul.f32 %v453, %v661
    %v677 = vmul.f32 %v458, %v661
    %v678 = vmul.f32 %v461, %v661
    %v679 = vmul.f32 %v466, %v661
    %v680 = vmul.f32 %v469, %v661
    %v681 = vmul.f32 %v474, %v661
    %v682 = vmul.f32 %v477, %v661
    %v683 = vmul.f32 %v482, %v661
    %v684 = vmul.f32 %v485, %v661
    %v685 = vmul.f32 %v490, %v661
    %v686 = vmul.f32 %v493, %v661
    %v687 = vmul.f32 %v498, %v661
    %v688 = vmul.f32 %v501, %v661
    %v689 = vmul.f32 %v506, %v661
    %v690 = vmul.f32 %v509, %v661
    %v691 = vmul.f32 %v514, %v661
    %v692 = vmul.f32 %v517, %v661
    %v693 = vmul.f32 %v522, %v661
    %v694 = vmul.f32 %v525, %v661
    %v695 = vmul.f32 %v530, %v661
    %v696 = vmul.f32 %v533, %v661
    %v697 = vmul.f32 %v538, %v661
    %v698 = vmul.f32 %v541, %v661
    %v699 = vmul.f32 %v546, %v661
    %v700 = vmul.f32 %v549, %v661
    %v701 = vmul.f32 %v554, %v661
    %v702 = vmul.f32 %v557, %v661
    %v703 = vmul.f32 %v562, %v661
    %v704 = vmul.f32 %v565, %v661
    %v705 = vmul.f32 %v570, %v661
    %v706 = vmul.f32 %v573, %v661
    %v707 = vmul.f32 %v578, %v661
    %v708 = vmul.f32 %v581, %v661
    %v709 = vmul.f32 %v586, %v661
    %v710 = vmul.f32 %v589, %v661
    %v711 = vmul.f32 %v594, %v661
    %v712 = vmul.f32 %v597, %v661
    %v713 = vmul.f32 %v602, %v661
    %v714 = vmul.f32 %v605, %v661
    %v715 = vmul.f32 %v610, %v661
    %v716 = vmul.f32 %v613, %v661
    %v717 = vmul.f32 %v618, %v661
    %v718 = vmul.f32 %v621, %v661
    %v719 = vmul.f32 %v626, %v661
    %v720 = vmul.f32 %v629, %v661
    %v721 = vmul.f32 %v634, %v661
    %v722 = vmul.f32 %v637, %v661
    %v723 = vmul.f32 %v642, %v661
    %v724 = vmul.f32 %v645, %v661
    %v725 = vmul.f32 %v650, %v661
    %v726 = vmul.f32 %v653, %v661
    %v727 = vld [vmem:[%s3] sm:$0x1]
    %v729 = vlaneseq
    %v730 = vshrl.u32 %v729, 7
    %v731 = vsub.s32 0, %v730
    %v732 = vrot.slane %v727, %v731
    %v734 = vadd.f32 %v663, %v732
    %v735 = vadd.f32 %v664, %v732
    %v736 = vadd.f32 %v665, %v732
    %v737 = vadd.f32 %v666, %v732
    %v738 = vadd.f32 %v667, %v732
    %v739 = vadd.f32 %v668, %v732
    %v740 = vadd.f32 %v669, %v732
    %v741 = vadd.f32 %v670, %v732
    %v742 = vadd.f32 %v671, %v732
    %v743 = vadd.f32 %v672, %v732
    %v744 = vadd.f32 %v673, %v732
    %v745 = vadd.f32 %v674, %v732
    %v746 = vadd.f32 %v675, %v732
    %v747 = vadd.f32 %v676, %v732
    %v748 = vadd.f32 %v677, %v732
    %v749 = vadd.f32 %v678, %v732
    %v750 = vadd.f32 %v679, %v732
    %v751 = vadd.f32 %v680, %v732
    %v752 = vadd.f32 %v681, %v732
    %v753 = vadd.f32 %v682, %v732
    %v754 = vadd.f32 %v683, %v732
    %v755 = vadd.f32 %v684, %v732
    %v756 = vadd.f32 %v685, %v732
    %v757 = vadd.f32 %v686, %v732
    %v758 = vadd.f32 %v687, %v732
    %v759 = vadd.f32 %v688, %v732
    %v760 = vadd.f32 %v689, %v732
    %v761 = vadd.f32 %v690, %v732
    %v762 = vadd.f32 %v691, %v732
    %v763 = vadd.f32 %v692, %v732
    %v764 = vadd.f32 %v693, %v732
    %v765 = vadd.f32 %v694, %v732
    %v766 = vadd.f32 %v695, %v732
    %v767 = vadd.f32 %v696, %v732
    %v768 = vadd.f32 %v697, %v732
    %v769 = vadd.f32 %v698, %v732
    %v770 = vadd.f32 %v699, %v732
    %v771 = vadd.f32 %v700, %v732
    %v772 = vadd.f32 %v701, %v732
    %v773 = vadd.f32 %v702, %v732
    %v774 = vadd.f32 %v703, %v732
    %v775 = vadd.f32 %v704, %v732
    %v776 = vadd.f32 %v705, %v732
    %v777 = vadd.f32 %v706, %v732
    %v778 = vadd.f32 %v707, %v732
    %v779 = vadd.f32 %v708, %v732
    %v780 = vadd.f32 %v709, %v732
    %v781 = vadd.f32 %v710, %v732
    %v782 = vadd.f32 %v711, %v732
    %v783 = vadd.f32 %v712, %v732
    %v784 = vadd.f32 %v713, %v732
    %v785 = vadd.f32 %v714, %v732
    %v786 = vadd.f32 %v715, %v732
    %v787 = vadd.f32 %v716, %v732
    %v788 = vadd.f32 %v717, %v732
    %v789 = vadd.f32 %v718, %v732
    %v790 = vadd.f32 %v719, %v732
    %v791 = vadd.f32 %v720, %v732
    %v792 = vadd.f32 %v721, %v732
    %v793 = vadd.f32 %v722, %v732
    %v794 = vadd.f32 %v723, %v732
    %v795 = vadd.f32 %v724, %v732
    %v796 = vadd.f32 %v725, %v732
    %v797 = vadd.f32 %v726, %v732
    %v798 = vmax.f32 %v734, 0.0
    %v799 = vmax.f32 %v735, 0.0
    %v800 = vmax.f32 %v736, 0.0
    %v801 = vmax.f32 %v737, 0.0
    %v802 = vmax.f32 %v738, 0.0
    %v803 = vmax.f32 %v739, 0.0
    %v804 = vmax.f32 %v740, 0.0
    %v805 = vmax.f32 %v741, 0.0
    %v806 = vmax.f32 %v742, 0.0
    %v807 = vmax.f32 %v743, 0.0
    %v808 = vmax.f32 %v744, 0.0
    %v809 = vmax.f32 %v745, 0.0
    %v810 = vmax.f32 %v746, 0.0
    %v811 = vmax.f32 %v747, 0.0
    %v812 = vmax.f32 %v748, 0.0
    %v813 = vmax.f32 %v749, 0.0
    %v814 = vmax.f32 %v750, 0.0
    %v815 = vmax.f32 %v751, 0.0
    %v816 = vmax.f32 %v752, 0.0
    %v817 = vmax.f32 %v753, 0.0
    %v818 = vmax.f32 %v754, 0.0
    %v819 = vmax.f32 %v755, 0.0
    %v820 = vmax.f32 %v756, 0.0
    %v821 = vmax.f32 %v757, 0.0
    %v822 = vmax.f32 %v758, 0.0
    %v823 = vmax.f32 %v759, 0.0
    %v824 = vmax.f32 %v760, 0.0
    %v825 = vmax.f32 %v761, 0.0
    %v826 = vmax.f32 %v762, 0.0
    %v827 = vmax.f32 %v763, 0.0
    %v828 = vmax.f32 %v764, 0.0
    %v829 = vmax.f32 %v765, 0.0
    %v830 = vmax.f32 %v766, 0.0
    %v831 = vmax.f32 %v767, 0.0
    %v832 = vmax.f32 %v768, 0.0
    %v833 = vmax.f32 %v769, 0.0
    %v834 = vmax.f32 %v770, 0.0
    %v835 = vmax.f32 %v771, 0.0
    %v836 = vmax.f32 %v772, 0.0
    %v837 = vmax.f32 %v773, 0.0
    %v838 = vmax.f32 %v774, 0.0
    %v839 = vmax.f32 %v775, 0.0
    %v840 = vmax.f32 %v776, 0.0
    %v841 = vmax.f32 %v777, 0.0
    %v842 = vmax.f32 %v778, 0.0
    %v843 = vmax.f32 %v779, 0.0
    %v844 = vmax.f32 %v780, 0.0
    %v845 = vmax.f32 %v781, 0.0
    %v846 = vmax.f32 %v782, 0.0
    %v847 = vmax.f32 %v783, 0.0
    %v848 = vmax.f32 %v784, 0.0
    %v849 = vmax.f32 %v785, 0.0
    %v850 = vmax.f32 %v786, 0.0
    %v851 = vmax.f32 %v787, 0.0
    %v852 = vmax.f32 %v788, 0.0
    %v853 = vmax.f32 %v789, 0.0
    %v854 = vmax.f32 %v790, 0.0
    %v855 = vmax.f32 %v791, 0.0
    %v856 = vmax.f32 %v792, 0.0
    %v857 = vmax.f32 %v793, 0.0
    %v858 = vmax.f32 %v794, 0.0
    %v859 = vmax.f32 %v795, 0.0
    %v860 = vmax.f32 %v796, 0.0
    %v861 = vmax.f32 %v797, 0.0
    %v862 = vpack.c.bf16 %v799, %v798
    %v863 = vpack.c.bf16 %v801, %v800
    %v864 = vpack.c.bf16 %v803, %v802
    %v865 = vpack.c.bf16 %v805, %v804
    %v866 = vpack.c.bf16 %v807, %v806
    %v867 = vpack.c.bf16 %v809, %v808
    %v868 = vpack.c.bf16 %v811, %v810
    %v869 = vpack.c.bf16 %v813, %v812
    %v870 = vpack.c.bf16 %v815, %v814
    %v871 = vpack.c.bf16 %v817, %v816
    %v872 = vpack.c.bf16 %v819, %v818
    %v873 = vpack.c.bf16 %v821, %v820
    %v874 = vpack.c.bf16 %v823, %v822
    %v875 = vpack.c.bf16 %v825, %v824
    %v876 = vpack.c.bf16 %v827, %v826
    %v877 = vpack.c.bf16 %v829, %v828
    %v878 = vpack.c.bf16 %v831, %v830
    %v879 = vpack.c.bf16 %v833, %v832
    %v880 = vpack.c.bf16 %v835, %v834
    %v881 = vpack.c.bf16 %v837, %v836
    %v882 = vpack.c.bf16 %v839, %v838
    %v883 = vpack.c.bf16 %v841, %v840
    %v884 = vpack.c.bf16 %v843, %v842
    %v885 = vpack.c.bf16 %v845, %v844
    %v886 = vpack.c.bf16 %v847, %v846
    %v887 = vpack.c.bf16 %v849, %v848
    %v888 = vpack.c.bf16 %v851, %v850
    %v889 = vpack.c.bf16 %v853, %v852
    %v890 = vpack.c.bf16 %v855, %v854
    %v891 = vpack.c.bf16 %v857, %v856
    %v892 = vpack.c.bf16 %v859, %v858
    %v893 = vpack.c.bf16 %v861, %v860
    %v926 = vunpack.c.l.b16 %v862
    %v927 = vunpack.c.h.b16 %v862
    %v928 = vunpack.c.l.b16 %v863
    %v929 = vunpack.c.h.b16 %v863
    %v930 = vunpack.c.l.b16 %v864
    %v931 = vunpack.c.h.b16 %v864
    %v932 = vunpack.c.l.b16 %v865
    %v933 = vunpack.c.h.b16 %v865
    %v934 = vunpack.c.l.b16 %v866
    %v935 = vunpack.c.h.b16 %v866
    %v936 = vunpack.c.l.b16 %v867
    %v937 = vunpack.c.h.b16 %v867
    %v938 = vunpack.c.l.b16 %v868
    %v939 = vunpack.c.h.b16 %v868
    %v940 = vunpack.c.l.b16 %v869
    %v941 = vunpack.c.h.b16 %v869
    %v942 = vunpack.c.l.b16 %v870
    %v943 = vunpack.c.h.b16 %v870
    %v944 = vunpack.c.l.b16 %v871
    %v945 = vunpack.c.h.b16 %v871
    %v946 = vunpack.c.l.b16 %v872
    %v947 = vunpack.c.h.b16 %v872
    %v948 = vunpack.c.l.b16 %v873
    %v949 = vunpack.c.h.b16 %v873
    %v950 = vunpack.c.l.b16 %v874
    %v951 = vunpack.c.h.b16 %v874
    %v952 = vunpack.c.l.b16 %v875
    %v953 = vunpack.c.h.b16 %v875
    %v954 = vunpack.c.l.b16 %v876
    %v955 = vunpack.c.h.b16 %v876
    %v956 = vunpack.c.l.b16 %v877
    %v957 = vunpack.c.h.b16 %v877
    %v958 = vunpack.c.l.b16 %v878
    %v959 = vunpack.c.h.b16 %v878
    %v960 = vunpack.c.l.b16 %v879
    %v961 = vunpack.c.h.b16 %v879
    %v962 = vunpack.c.l.b16 %v880
    %v963 = vunpack.c.h.b16 %v880
    %v964 = vunpack.c.l.b16 %v881
    %v965 = vunpack.c.h.b16 %v881
    %v966 = vunpack.c.l.b16 %v882
    %v967 = vunpack.c.h.b16 %v882
    %v968 = vunpack.c.l.b16 %v883
    %v969 = vunpack.c.h.b16 %v883
    %v970 = vunpack.c.l.b16 %v884
    %v971 = vunpack.c.h.b16 %v884
    %v972 = vunpack.c.l.b16 %v885
    %v973 = vunpack.c.h.b16 %v885
    %v974 = vunpack.c.l.b16 %v886
    %v975 = vunpack.c.h.b16 %v886
    %v976 = vunpack.c.l.b16 %v887
    %v977 = vunpack.c.h.b16 %v887
    %v978 = vunpack.c.l.b16 %v888
    %v979 = vunpack.c.h.b16 %v888
    %v980 = vunpack.c.l.b16 %v889
    %v981 = vunpack.c.h.b16 %v889
    %v982 = vunpack.c.l.b16 %v890
    %v983 = vunpack.c.h.b16 %v890
    %v984 = vunpack.c.l.b16 %v891
    %v985 = vunpack.c.h.b16 %v891
    %v986 = vunpack.c.l.b16 %v892
    %v987 = vunpack.c.h.b16 %v892
    %v988 = vunpack.c.l.b16 %v893
    %v989 = vunpack.c.h.b16 %v893
    %v990 = vpack.c.b16 %v926, %v926
    %v991 = vpack.c.b16 %v927, %v927
    %v992 = vpack.c.b16 %v928, %v928
    %v993 = vpack.c.b16 %v929, %v929
    %v994 = vpack.c.b16 %v930, %v930
    %v995 = vpack.c.b16 %v931, %v931
    %v996 = vpack.c.b16 %v932, %v932
    %v997 = vpack.c.b16 %v933, %v933
    %v998 = vpack.c.b16 %v934, %v934
    %v999 = vpack.c.b16 %v935, %v935
    %v1000 = vpack.c.b16 %v936, %v936
    %v1001 = vpack.c.b16 %v937, %v937
    %v1002 = vpack.c.b16 %v938, %v938
    %v1003 = vpack.c.b16 %v939, %v939
    %v1004 = vpack.c.b16 %v940, %v940
    %v1005 = vpack.c.b16 %v941, %v941
    %v1006 = vpack.c.b16 %v942, %v942
    %v1007 = vpack.c.b16 %v943, %v943
    %v1008 = vpack.c.b16 %v944, %v944
    %v1009 = vpack.c.b16 %v945, %v945
    %v1010 = vpack.c.b16 %v946, %v946
    %v1011 = vpack.c.b16 %v947, %v947
    %v1012 = vpack.c.b16 %v948, %v948
    %v1013 = vpack.c.b16 %v949, %v949
    %v1014 = vpack.c.b16 %v950, %v950
    %v1015 = vpack.c.b16 %v951, %v951
    %v1016 = vpack.c.b16 %v952, %v952
    %v1017 = vpack.c.b16 %v953, %v953
    %v1018 = vpack.c.b16 %v954, %v954
    %v1019 = vpack.c.b16 %v955, %v955
    %v1020 = vpack.c.b16 %v956, %v956
    %v1021 = vpack.c.b16 %v957, %v957
    %v1022 = vpack.c.b16 %v958, %v958
    %v1023 = vpack.c.b16 %v959, %v959
    %v1024 = vpack.c.b16 %v960, %v960
    %v1025 = vpack.c.b16 %v961, %v961
    %v1026 = vpack.c.b16 %v962, %v962
    %v1027 = vpack.c.b16 %v963, %v963
    %v1028 = vpack.c.b16 %v964, %v964
    %v1029 = vpack.c.b16 %v965, %v965
    %v1030 = vpack.c.b16 %v966, %v966
    %v1031 = vpack.c.b16 %v967, %v967
    %v1032 = vpack.c.b16 %v968, %v968
    %v1033 = vpack.c.b16 %v969, %v969
    %v1034 = vpack.c.b16 %v970, %v970
    %v1035 = vpack.c.b16 %v971, %v971
    %v1036 = vpack.c.b16 %v972, %v972
    %v1037 = vpack.c.b16 %v973, %v973
    %v1038 = vpack.c.b16 %v974, %v974
    %v1039 = vpack.c.b16 %v975, %v975
    %v1040 = vpack.c.b16 %v976, %v976
    %v1041 = vpack.c.b16 %v977, %v977
    %v1042 = vpack.c.b16 %v978, %v978
    %v1043 = vpack.c.b16 %v979, %v979
    %v1044 = vpack.c.b16 %v980, %v980
    %v1045 = vpack.c.b16 %v981, %v981
    %v1046 = vpack.c.b16 %v982, %v982
    %v1047 = vpack.c.b16 %v983, %v983
    %v1048 = vpack.c.b16 %v984, %v984
    %v1049 = vpack.c.b16 %v985, %v985
    %v1050 = vpack.c.b16 %v986, %v986
    %v1051 = vpack.c.b16 %v987, %v987
    %v1052 = vpack.c.b16 %v988, %v988
    %v1053 = vpack.c.b16 %v989, %v989
    %1118 = vst [vmem:[#allocation7] sm:$0xf] %v990
    %1119 = vst [vmem:[#allocation7 + $0x4] sm:$0xf] %v991
    %1120 = vst [vmem:[#allocation7 + $0x8] sm:$0xf] %v992
    %1121 = vst [vmem:[#allocation7 + $0xc] sm:$0xf] %v993
    %1122 = vst [vmem:[#allocation7 + $0x10] sm:$0xf] %v994
    %1123 = vst [vmem:[#allocation7 + $0x14] sm:$0xf] %v995
    %1124 = vst [vmem:[#allocation7 + $0x18] sm:$0xf] %v996
    %1125 = vst [vmem:[#allocation7 + $0x1c] sm:$0xf] %v997
    %1126 = vst [vmem:[#allocation7 + $0x20] sm:$0xf] %v998
    %1127 = vst [vmem:[#allocation7 + $0x24] sm:$0xf] %v999
    %1128 = vst [vmem:[#allocation7 + $0x28] sm:$0xf] %v1000
    %1129 = vst [vmem:[#allocation7 + $0x2c] sm:$0xf] %v1001
    %1130 = vst [vmem:[#allocation7 + $0x30] sm:$0xf] %v1002
    %1131 = vst [vmem:[#allocation7 + $0x34] sm:$0xf] %v1003
    %1132 = vst [vmem:[#allocation7 + $0x38] sm:$0xf] %v1004
    %1133 = vst [vmem:[#allocation7 + $0x3c] sm:$0xf] %v1005
    %1134 = vst [vmem:[#allocation7 + $0x40] sm:$0xf] %v1006
    %1135 = vst [vmem:[#allocation7 + $0x44] sm:$0xf] %v1007
    %1136 = vst [vmem:[#allocation7 + $0x48] sm:$0xf] %v1008
    %1137 = vst [vmem:[#allocation7 + $0x4c] sm:$0xf] %v1009
    %1138 = vst [vmem:[#allocation7 + $0x50] sm:$0xf] %v1010
    %1139 = vst [vmem:[#allocation7 + $0x54] sm:$0xf] %v1011
    %1140 = vst [vmem:[#allocation7 + $0x58] sm:$0xf] %v1012
    %1141 = vst [vmem:[#allocation7 + $0x5c] sm:$0xf] %v1013
    %1142 = vst [vmem:[#allocation7 + $0x60] sm:$0xf] %v1014
    %1143 = vst [vmem:[#allocation7 + $0x64] sm:$0xf] %v1015
    %1144 = vst [vmem:[#allocation7 + $0x68] sm:$0xf] %v1016
    %1145 = vst [vmem:[#allocation7 + $0x6c] sm:$0xf] %v1017
    %1146 = vst [vmem:[#allocation7 + $0x70] sm:$0xf] %v1018
    %1147 = vst [vmem:[#allocation7 + $0x74] sm:$0xf] %v1019
    %1148 = vst [vmem:[#allocation7 + $0x78] sm:$0xf] %v1020
    %1149 = vst [vmem:[#allocation7 + $0x7c] sm:$0xf] %v1021
    %1150 = vst [vmem:[#allocation7 + $0x80] sm:$0xf] %v1022
    %1151 = vst [vmem:[#allocation7 + $0x84] sm:$0xf] %v1023
    %1152 = vst [vmem:[#allocation7 + $0x88] sm:$0xf] %v1024
    %1153 = vst [vmem:[#allocation7 + $0x8c] sm:$0xf] %v1025
    %1154 = vst [vmem:[#allocation7 + $0x90] sm:$0xf] %v1026
    %1155 = vst [vmem:[#allocation7 + $0x94] sm:$0xf] %v1027
    %1156 = vst [vmem:[#allocation7 + $0x98] sm:$0xf] %v1028
    %1157 = vst [vmem:[#allocation7 + $0x9c] sm:$0xf] %v1029
    %1158 = vst [vmem:[#allocation7 + $0xa0] sm:$0xf] %v1030
    %1159 = vst [vmem:[#allocation7 + $0xa4] sm:$0xf] %v1031
    %1160 = vst [vmem:[#allocation7 + $0xa8] sm:$0xf] %v1032
    %1161 = vst [vmem:[#allocation7 + $0xac] sm:$0xf] %v1033
    %1162 = vst [vmem:[#allocation7 + $0xb0] sm:$0xf] %v1034
    %1163 = vst [vmem:[#allocation7 + $0xb4] sm:$0xf] %v1035
    %1164 = vst [vmem:[#allocation7 + $0xb8] sm:$0xf] %v1036
    %1165 = vst [vmem:[#allocation7 + $0xbc] sm:$0xf] %v1037
    %1166 = vst [vmem:[#allocation7 + $0xc0] sm:$0xf] %v1038
    %1167 = vst [vmem:[#allocation7 + $0xc4] sm:$0xf] %v1039
    %1168 = vst [vmem:[#allocation7 + $0xc8] sm:$0xf] %v1040
    %1169 = vst [vmem:[#allocation7 + $0xcc] sm:$0xf] %v1041
    %1170 = vst [vmem:[#allocation7 + $0xd0] sm:$0xf] %v1042
    %1171 = vst [vmem:[#allocation7 + $0xd4] sm:$0xf] %v1043
    %1172 = vst [vmem:[#allocation7 + $0xd8] sm:$0xf] %v1044
    %1173 = vst [vmem:[#allocation7 + $0xdc] sm:$0xf] %v1045
    %1174 = vst [vmem:[#allocation7 + $0xe0] sm:$0xf] %v1046
    %1175 = vst [vmem:[#allocation7 + $0xe4] sm:$0xf] %v1047
    %1176 = vst [vmem:[#allocation7 + $0xe8] sm:$0xf] %v1048
    %1177 = vst [vmem:[#allocation7 + $0xec] sm:$0xf] %v1049
    %1178 = vst [vmem:[#allocation7 + $0xf0] sm:$0xf] %v1050
    %1179 = vst [vmem:[#allocation7 + $0xf4] sm:$0xf] %v1051
    %1180 = vst [vmem:[#allocation7 + $0xf8] sm:$0xf] %v1052
    %1181 = vst [vmem:[#allocation7 + $0xfc] sm:$0xf] %v1053
    // Predicated region
    $region26: #{tpu_custom_call.1} parent=1 // pred_check
      _
    $region27: #{tpu_custom_call.1} parent=1 // pred_check_branch
      %1183 = sbr.rel (0) target = $region29
    $region28: #{tpu_custom_call.1} parent=1 // pred_region
      %s1185 = ssub.s32 4096, 4096
      %1186 = vsyncadd [#allocation4], %s1185
      %s1187 = sshll.u32 [#allocation7], 4
      %s1188 = int_to_ptr.vmem [resolvable:$true] %s1187
      %1193 = dma.vmem_to_hbm [thread:$0]  %s1188, 4096, %s4, [#allocation4], 64, 64, 4
    $region29: #{tpu_custom_call.1} parent=1 // pred_fallthru
      _
    // Predicated region
    $region30: #{tpu_custom_call.1} parent=1 // pred_check
      _
    $region31: #{tpu_custom_call.1} parent=1 // pred_check_branch
      %1195 = sbr.rel (0) target = $region33
    $region32: #{tpu_custom_call.1} parent=1 // pred_region
      %1196 = dma.done [#allocation4], 4096
    $region33: #{tpu_custom_call.1} parent=1 // pred_fallthru
      _
    %1197 = vsyncpa [#allocation3], 1
    %1198 = vsyncpa [#allocation6], 1
    %1199 = vsyncpa [#allocation4], 1

// kernel: tpu_custom_call.1
$region0: #{tpu_custom_call.1}
  #allocation0 [shape = 'u32[]', space=smem, size = 0x4, offset = 0x4, fixed_abs, tag = 'smem constant byte address 0x4 - core index']
  #allocation1 [shape = 'u32[144,128]{1,0:T(1,128)}', space=vmem, size = 0x12000, scoped, tag = 'internal scratch']
  %s0 = inlined_call_operand.hbm [shape: bf16[512,128], index: 0, kind: input, shape index: {}]
  %s1 = inlined_call_operand.hbm [shape: bf16[128,128], index: 1, kind: input, shape index: {}]
  %s2 = inlined_call_operand.vmem [shape: f32[1,128], index: 2, kind: input, shape index: {}]
  %s3 = inlined_call_operand.vmem [shape: f32[1,128], index: 3, kind: input, shape index: {}]
  %s4 = inlined_call_operand.hbm [shape: bf16[512,128], index: 4, kind: output, shape index: {}]
  %s5 = sld [smem:[#allocation0]]
  $region34: #{tpu_custom_call.1} parent=0
    _
  %s7 = ssub.s32 1, %s5
  %s8 = scalar_select 0, %s7, %s5
  $region1: #{tpu_custom_call.1} parent=0
    #allocation2 [shape = 'u8[131072]{0}', space=vmem, size = 0x20000, scoped, tag = 'input window, operand 0, single buffered']
    #allocation3 [shape = 's32[1]{0}', space=sflag, size = 0x4, scoped, tag = 'scoped memory for tpu_custom_call.1']
    #allocation4 [shape = 's32[1]{0}', space=sflag, size = 0x4, scoped, tag = 'scoped memory for tpu_custom_call.1']
    #allocation5 [shape = 'u8[32768]{0}', space=vmem, size = 0x8000, scoped, tag = 'input window, operand 1, single buffered']
    #allocation6 [shape = 's32[1]{0}', space=sflag, size = 0x4, scoped, tag = 'scoped memory for tpu_custom_call.1']
    #allocation7 [shape = 'u8[131072]{0}', space=vmem, size = 0x20000, scoped, tag = 'output window, operand 0, single buffered']
    %9 = vsyncpa [#allocation3], 0
    %10 = vsyncpa [#allocation6], 0
    %11 = vsyncpa [#allocation4], 0
    // Predicated region
    $region2: #{tpu_custom_call.1} parent=1 // pred_check
      _
    $region3: #{tpu_custom_call.1} parent=1 // pred_check_branch
      %13 = sbr.rel (0) target = $region5
    $region4: #{tpu_custom_call.1} parent=1 // pred_region
      %s15 = ssub.s32 4096, 4096
      %16 = vsyncadd [#allocation3], %s15
      %s17 = sshll.u32 [#allocation2], 4
      %s18 = int_to_ptr.vmem [resolvable:$true] %s17
      %23 = dma.hbm_to_vmem [thread:$0]  %s0, 4096, %s18, [#allocation3], 64, 64, 4
    $region5: #{tpu_custom_call.1} parent=1 // pred_fallthru
      _
    // Predicated region
    $region6: #{tpu_custom_call.1} parent=1 // pred_check
      _
    $region7: #{tpu_custom_call.1} parent=1 // pred_check_branch
      %25 = sbr.rel (0) target = $region9
    $region8: #{tpu_custom_call.1} parent=1 // pred_region
      %s27 = ssub.s32 1024, 1024
      %28 = vsyncadd [#allocation6], %s27
      %s29 = sshll.u32 [#allocation5], 4
      %s30 = int_to_ptr.vmem [resolvable:$true] %s29
      %35 = dma.hbm_to_vmem [thread:$0]  %s1, 1024, %s30, [#allocation6], 64, 64, 4
    $region9: #{tpu_custom_call.1} parent=1 // pred_fallthru
      _
    // Predicated region
    $region10: #{tpu_custom_call.1} parent=1 // pred_check
      _
    $region11: #{tpu_custom_call.1} parent=1 // pred_check_branch
      %37 = sbr.rel (0) target = $region13
    $region12: #{tpu_custom_call.1} parent=1 // pred_region
      _
    $region13: #{tpu_custom_call.1} parent=1 // pred_fallthru
      _
    // Predicated region
    $region14: #{tpu_custom_call.1} parent=1 // pred_check
      _
    $region15: #{tpu_custom_call.1} parent=1 // pred_check_branch
      %39 = sbr.rel (0) target = $region17
    $region16: #{tpu_custom_call.1} parent=1 // pred_region
      _
    $region17: #{tpu_custom_call.1} parent=1 // pred_fallthru
      _
    // Predicated region
    $region18: #{tpu_custom_call.1} parent=1 // pred_check
      _
    $region19: #{tpu_custom_call.1} parent=1 // pred_check_branch
      %41 = sbr.rel (0) target = $region21
    $region20: #{tpu_custom_call.1} parent=1 // pred_region
      %42 = dma.done [#allocation3], 4096
    $region21: #{tpu_custom_call.1} parent=1 // pred_fallthru
      _
    // Predicated region
    $region22: #{tpu_custom_call.1} parent=1 // pred_check
      _
    $region23: #{tpu_custom_call.1} parent=1 // pred_check_branch
      %44 = sbr.rel (0) target = $region25
    $region24: #{tpu_custom_call.1} parent=1 // pred_region
      %45 = dma.done [#allocation6], 1024
    $region25: #{tpu_custom_call.1} parent=1 // pred_fallthru
      _
    %v47 = vld [vmem:[#allocation2] sm:$0xf]
    %v48 = vld [vmem:[#allocation2 + $0x4] sm:$0xf]
    %v49 = vld [vmem:[#allocation2 + $0x8] sm:$0xf]
    %v50 = vld [vmem:[#allocation2 + $0xc] sm:$0xf]
    %v51 = vld [vmem:[#allocation2 + $0x10] sm:$0xf]
    %v52 = vld [vmem:[#allocation2 + $0x14] sm:$0xf]
    %v53 = vld [vmem:[#allocation2 + $0x18] sm:$0xf]
    %v54 = vld [vmem:[#allocation2 + $0x1c] sm:$0xf]
    %v55 = vld [vmem:[#allocation2 + $0x20] sm:$0xf]
    %v56 = vld [vmem:[#allocation2 + $0x24] sm:$0xf]
    %v57 = vld [vmem:[#allocation2 + $0x28] sm:$0xf]
    %v58 = vld [vmem:[#allocation2 + $0x2c] sm:$0xf]
    %v59 = vld [vmem:[#allocation2 + $0x30] sm:$0xf]
    %v60 = vld [vmem:[#allocation2 + $0x34] sm:$0xf]
    %v61 = vld [vmem:[#allocation2 + $0x38] sm:$0xf]
    %v62 = vld [vmem:[#allocation2 + $0x3c] sm:$0xf]
    %v63 = vld [vmem:[#allocation2 + $0x40] sm:$0xf]
    %v64 = vld [vmem:[#allocation2 + $0x44] sm:$0xf]
    %v65 = vld [vmem:[#allocation2 + $0x48] sm:$0xf]
    %v66 = vld [vmem:[#allocation2 + $0x4c] sm:$0xf]
    %v67 = vld [vmem:[#allocation2 + $0x50] sm:$0xf]
    %v68 = vld [vmem:[#allocation2 + $0x54] sm:$0xf]
    %v69 = vld [vmem:[#allocation2 + $0x58] sm:$0xf]
    %v70 = vld [vmem:[#allocation2 + $0x5c] sm:$0xf]
    %v71 = vld [vmem:[#allocation2 + $0x60] sm:$0xf]
    %v72 = vld [vmem:[#allocation2 + $0x64] sm:$0xf]
    %v73 = vld [vmem:[#allocation2 + $0x68] sm:$0xf]
    %v74 = vld [vmem:[#allocation2 + $0x6c] sm:$0xf]
    %v75 = vld [vmem:[#allocation2 + $0x70] sm:$0xf]
    %v76 = vld [vmem:[#allocation2 + $0x74] sm:$0xf]
    %v77 = vld [vmem:[#allocation2 + $0x78] sm:$0xf]
    %v78 = vld [vmem:[#allocation2 + $0x7c] sm:$0xf]
    %v79 = vld [vmem:[#allocation2 + $0x80] sm:$0xf]
    %v80 = vld [vmem:[#allocation2 + $0x84] sm:$0xf]
    %v81 = vld [vmem:[#allocation2 + $0x88] sm:$0xf]
    %v82 = vld [vmem:[#allocation2 + $0x8c] sm:$0xf]
    %v83 = vld [vmem:[#allocation2 + $0x90] sm:$0xf]
    %v84 = vld [vmem:[#allocation2 + $0x94] sm:$0xf]
    %v85 = vld [vmem:[#allocation2 + $0x98] sm:$0xf]
    %v86 = vld [vmem:[#allocation2 + $0x9c] sm:$0xf]
    %v87 = vld [vmem:[#allocation2 + $0xa0] sm:$0xf]
    %v88 = vld [vmem:[#allocation2 + $0xa4] sm:$0xf]
    %v89 = vld [vmem:[#allocation2 + $0xa8] sm:$0xf]
    %v90 = vld [vmem:[#allocation2 + $0xac] sm:$0xf]
    %v91 = vld [vmem:[#allocation2 + $0xb0] sm:$0xf]
    %v92 = vld [vmem:[#allocation2 + $0xb4] sm:$0xf]
    %v93 = vld [vmem:[#allocation2 + $0xb8] sm:$0xf]
    %v94 = vld [vmem:[#allocation2 + $0xbc] sm:$0xf]
    %v95 = vld [vmem:[#allocation2 + $0xc0] sm:$0xf]
    %v96 = vld [vmem:[#allocation2 + $0xc4] sm:$0xf]
    %v97 = vld [vmem:[#allocation2 + $0xc8] sm:$0xf]
    %v98 = vld [vmem:[#allocation2 + $0xcc] sm:$0xf]
    %v99 = vld [vmem:[#allocation2 + $0xd0] sm:$0xf]
    %v100 = vld [vmem:[#allocation2 + $0xd4] sm:$0xf]
    %v101 = vld [vmem:[#allocation2 + $0xd8] sm:$0xf]
    %v102 = vld [vmem:[#allocation2 + $0xdc] sm:$0xf]
    %v103 = vld [vmem:[#allocation2 + $0xe0] sm:$0xf]
    %v104 = vld [vmem:[#allocation2 + $0xe4] sm:$0xf]
    %v105 = vld [vmem:[#allocation2 + $0xe8] sm:$0xf]
    %v106 = vld [vmem:[#allocation2 + $0xec] sm:$0xf]
    %v107 = vld [vmem:[#allocation2 + $0xf0] sm:$0xf]
    %v108 = vld [vmem:[#allocation2 + $0xf4] sm:$0xf]
    %v109 = vld [vmem:[#allocation2 + $0xf8] sm:$0xf]
    %v110 = vld [vmem:[#allocation2 + $0xfc] sm:$0xf]
    %v111 = vld [vmem:[#allocation5] sm:$0xf]
    %v112 = vld [vmem:[#allocation5 + $0x4] sm:$0xf]
    %v113 = vld [vmem:[#allocation5 + $0x8] sm:$0xf]
    %v114 = vld [vmem:[#allocation5 + $0xc] sm:$0xf]
    %v115 = vld [vmem:[#allocation5 + $0x10] sm:$0xf]
    %v116 = vld [vmem:[#allocation5 + $0x14] sm:$0xf]
    %v117 = vld [vmem:[#allocation5 + $0x18] sm:$0xf]
    %v118 = vld [vmem:[#allocation5 + $0x1c] sm:$0xf]
    %v119 = vld [vmem:[#allocation5 + $0x20] sm:$0xf]
    %v120 = vld [vmem:[#allocation5 + $0x24] sm:$0xf]
    %v121 = vld [vmem:[#allocation5 + $0x28] sm:$0xf]
    %v122 = vld [vmem:[#allocation5 + $0x2c] sm:$0xf]
    %v123 = vld [vmem:[#allocation5 + $0x30] sm:$0xf]
    %v124 = vld [vmem:[#allocation5 + $0x34] sm:$0xf]
    %v125 = vld [vmem:[#allocation5 + $0x38] sm:$0xf]
    %v126 = vld [vmem:[#allocation5 + $0x3c] sm:$0xf]
    %v191 = vunpack.c.l.b16 %v47
    %v192 = vunpack.c.l.b16 %v48
    %v193 = vunpack.c.l.b16 %v49
    %v194 = vunpack.c.l.b16 %v50
    %v195 = vunpack.c.l.b16 %v51
    %v196 = vunpack.c.l.b16 %v52
    %v197 = vunpack.c.l.b16 %v53
    %v198 = vunpack.c.l.b16 %v54
    %v199 = vunpack.c.l.b16 %v55
    %v200 = vunpack.c.l.b16 %v56
    %v201 = vunpack.c.l.b16 %v57
    %v202 = vunpack.c.l.b16 %v58
    %v203 = vunpack.c.l.b16 %v59
    %v204 = vunpack.c.l.b16 %v60
    %v205 = vunpack.c.l.b16 %v61
    %v206 = vunpack.c.l.b16 %v62
    %v207 = vunpack.c.l.b16 %v63
    %v208 = vunpack.c.l.b16 %v64
    %v209 = vunpack.c.l.b16 %v65
    %v210 = vunpack.c.l.b16 %v66
    %v211 = vunpack.c.l.b16 %v67
    %v212 = vunpack.c.l.b16 %v68
    %v213 = vunpack.c.l.b16 %v69
    %v214 = vunpack.c.l.b16 %v70
    %v215 = vunpack.c.l.b16 %v71
    %v216 = vunpack.c.l.b16 %v72
    %v217 = vunpack.c.l.b16 %v73
    %v218 = vunpack.c.l.b16 %v74
    %v219 = vunpack.c.l.b16 %v75
    %v220 = vunpack.c.l.b16 %v76
    %v221 = vunpack.c.l.b16 %v77
    %v222 = vunpack.c.l.b16 %v78
    %v223 = vunpack.c.l.b16 %v79
    %v224 = vunpack.c.l.b16 %v80
    %v225 = vunpack.c.l.b16 %v81
    %v226 = vunpack.c.l.b16 %v82
    %v227 = vunpack.c.l.b16 %v83
    %v228 = vunpack.c.l.b16 %v84
    %v229 = vunpack.c.l.b16 %v85
    %v230 = vunpack.c.l.b16 %v86
    %v231 = vunpack.c.l.b16 %v87
    %v232 = vunpack.c.l.b16 %v88
    %v233 = vunpack.c.l.b16 %v89
    %v234 = vunpack.c.l.b16 %v90
    %v235 = vunpack.c.l.b16 %v91
    %v236 = vunpack.c.l.b16 %v92
    %v237 = vunpack.c.l.b16 %v93
    %v238 = vunpack.c.l.b16 %v94
    %v239 = vunpack.c.l.b16 %v95
    %v240 = vunpack.c.l.b16 %v96
    %v241 = vunpack.c.l.b16 %v97
    %v242 = vunpack.c.l.b16 %v98
    %v243 = vunpack.c.l.b16 %v99
    %v244 = vunpack.c.l.b16 %v100
    %v245 = vunpack.c.l.b16 %v101
    %v246 = vunpack.c.l.b16 %v102
    %v247 = vunpack.c.l.b16 %v103
    %v248 = vunpack.c.l.b16 %v104
    %v249 = vunpack.c.l.b16 %v105
    %v250 = vunpack.c.l.b16 %v106
    %v251 = vunpack.c.l.b16 %v107
    %v252 = vunpack.c.l.b16 %v108
    %v253 = vunpack.c.l.b16 %v109
    %v254 = vunpack.c.l.b16 %v110
    %v255 = vpack.c.b16 %v192, %v191
    %v256 = vpack.c.b16 %v194, %v193
    %v257 = vpack.c.b16 %v196, %v195
    %v258 = vpack.c.b16 %v198, %v197
    %v259 = vpack.c.b16 %v200, %v199
    %v260 = vpack.c.b16 %v202, %v201
    %v261 = vpack.c.b16 %v204, %v203
    %v262 = vpack.c.b16 %v206, %v205
    %v263 = vpack.c.b16 %v208, %v207
    %v264 = vpack.c.b16 %v210, %v209
    %v265 = vpack.c.b16 %v212, %v211
    %v266 = vpack.c.b16 %v214, %v213
    %v267 = vpack.c.b16 %v216, %v215
    %v268 = vpack.c.b16 %v218, %v217
    %v269 = vpack.c.b16 %v220, %v219
    %v270 = vpack.c.b16 %v222, %v221
    %v271 = vpack.c.b16 %v224, %v223
    %v272 = vpack.c.b16 %v226, %v225
    %v273 = vpack.c.b16 %v228, %v227
    %v274 = vpack.c.b16 %v230, %v229
    %v275 = vpack.c.b16 %v232, %v231
    %v276 = vpack.c.b16 %v234, %v233
    %v277 = vpack.c.b16 %v236, %v235
    %v278 = vpack.c.b16 %v238, %v237
    %v279 = vpack.c.b16 %v240, %v239
    %v280 = vpack.c.b16 %v242, %v241
    %v281 = vpack.c.b16 %v244, %v243
    %v282 = vpack.c.b16 %v246, %v245
    %v283 = vpack.c.b16 %v248, %v247
    %v284 = vpack.c.b16 %v250, %v249
    %v285 = vpack.c.b16 %v252, %v251
    %v286 = vpack.c.b16 %v254, %v253
    %v335 = vunpack.c.l.b16 %v111
    %v336 = vunpack.c.l.b16 %v112
    %v337 = vunpack.c.l.b16 %v113
    %v338 = vunpack.c.l.b16 %v114
    %v339 = vunpack.c.l.b16 %v115
    %v340 = vunpack.c.l.b16 %v116
    %v341 = vunpack.c.l.b16 %v117
    %v342 = vunpack.c.l.b16 %v118
    %v343 = vunpack.c.l.b16 %v119
    %v344 = vunpack.c.l.b16 %v120
    %v345 = vunpack.c.l.b16 %v121
    %v346 = vunpack.c.l.b16 %v122
    %v347 = vunpack.c.l.b16 %v123
    %v348 = vunpack.c.l.b16 %v124
    %v349 = vunpack.c.l.b16 %v125
    %v350 = vunpack.c.l.b16 %v126
    %v351 = vpack.c.b16 %v336, %v335
    %v352 = vpack.c.b16 %v338, %v337
    %v353 = vpack.c.b16 %v340, %v339
    %v354 = vpack.c.b16 %v342, %v341
    %v355 = vpack.c.b16 %v344, %v343
    %v356 = vpack.c.b16 %v346, %v345
    %v357 = vpack.c.b16 %v348, %v347
    %v358 = vpack.c.b16 %v350, %v349
    %367 = vmatprep.subr.bf16.mxu0 0
    %368 = vmatpush1.bf16.msra.mxu0 %v358
    %369 = vmatprep.subr.bf16.mxu0 0
    %370 = vmatpush1.bf16.msra.mxu0 %v357
    %371 = vmatprep.subr.bf16.mxu0 0
    %372 = vmatpush1.bf16.msra.mxu0 %v356
    %373 = vmatprep.subr.bf16.mxu0 0
    %374 = vmatpush1.bf16.msra.mxu0 %v355
    %375 = vmatprep.subr.bf16.mxu0 0
    %376 = vmatpush1.bf16.msra.mxu0 %v354
    %377 = vmatprep.subr.bf16.mxu0 0
    %378 = vmatpush1.bf16.msra.mxu0 %v353
    %379 = vmatprep.subr.bf16.mxu0 0
    %380 = vmatpush1.bf16.msra.mxu0 %v352
    %381 = vmatprep.subr.bf16.mxu0 0
    %382 = vmatpush1.bf16.msra.mxu0 %v351
    %383 = vmatprep.subr.bf16.mxu0 0
    %384 = vmatpush2.bf16.msra.mxu0 0
    %385 = vmatprep.subr.bf16.mxu0 0
    %386 = vmatpush2.bf16.msra.mxu0 0
    %387 = vmatprep.subr.bf16.mxu0 0
    %388 = vmatpush2.bf16.msra.mxu0 0
    %389 = vmatprep.subr.bf16.mxu0 0
    %390 = vmatpush2.bf16.msra.mxu0 0
    %391 = vmatprep.subr.bf16.mxu0 0
    %392 = vmatpush2.bf16.msra.mxu0 0
    %393 = vmatprep.subr.bf16.mxu0 0
    %394 = vmatpush2.bf16.msra.mxu0 0
    %395 = vmatprep.subr.bf16.mxu0 0
    %396 = vmatpush2.bf16.msra.mxu0 0
    %397 = vmatprep.subr.bf16.mxu0 0
    %398 = vmatpush2.bf16.msra.mxu0 0
    %399 = vmatprep.mubr.bf16.mxu0 0
    %400 = vmatmul.mubr.bf16.gmra.mxu0 %v255
    %v401 = vpop.f32.mrf.mxu0
    %v402 = vadd.f32 0.0, %v401
    %v403 = vpop.f32.mrf.mxu0
    %v404 = vpop.f32.mrf.mxu0
    %v405 = vadd.f32 0.0, %v404
    %v406 = vpop.f32.mrf.mxu0
    %407 = vmatprep.mubr.bf16.mxu0 0
    %408 = vmatmul.mubr.bf16.gmra.mxu0 %v256
    %v409 = vpop.f32.mrf.mxu0
    %v410 = vadd.f32 0.0, %v409
    %v411 = vpop.f32.mrf.mxu0
    %v412 = vpop.f32.mrf.mxu0
    %v413 = vadd.f32 0.0, %v412
    %v414 = vpop.f32.mrf.mxu0
    %415 = vmatprep.mubr.bf16.mxu0 0
    %416 = vmatmul.mubr.bf16.gmra.mxu0 %v257
    %v417 = vpop.f32.mrf.mxu0
    %v418 = vadd.f32 0.0, %v417
    %v419 = vpop.f32.mrf.mxu0
    %v420 = vpop.f32.mrf.mxu0
    %v421 = vadd.f32 0.0, %v420
    %v422 = vpop.f32.mrf.mxu0
    %423 = vmatprep.mubr.bf16.mxu0 0
    %424 = vmatmul.mubr.bf16.gmra.mxu0 %v258
    %v425 = vpop.f32.mrf.mxu0
    %v426 = vadd.f32 0.0, %v425
    %v427 = vpop.f32.mrf.mxu0
    %v428 = vpop.f32.mrf.mxu0
    %v429 = vadd.f32 0.0, %v428
    %v430 = vpop.f32.mrf.mxu0
    %431 = vmatprep.mubr.bf16.mxu0 0
    %432 = vmatmul.mubr.bf16.gmra.mxu0 %v259
    %v433 = vpop.f32.mrf.mxu0
    %v434 = vadd.f32 0.0, %v433
    %v435 = vpop.f32.mrf.mxu0
    %v436 = vpop.f32.mrf.mxu0
    %v437 = vadd.f32 0.0, %v436
    %v438 = vpop.f32.mrf.mxu0
    %439 = vmatprep.mubr.bf16.mxu0 0
    %440 = vmatmul.mubr.bf16.gmra.mxu0 %v260
    %v441 = vpop.f32.mrf.mxu0
    %v442 = vadd.f32 0.0, %v441
    %v443 = vpop.f32.mrf.mxu0
    %v444 = vpop.f32.mrf.mxu0
    %v445 = vadd.f32 0.0, %v444
    %v446 = vpop.f32.mrf.mxu0
    %447 = vmatprep.mubr.bf16.mxu0 0
    %448 = vmatmul.mubr.bf16.gmra.mxu0 %v261
    %v449 = vpop.f32.mrf.mxu0
    %v450 = vadd.f32 0.0, %v449
    %v451 = vpop.f32.mrf.mxu0
    %v452 = vpop.f32.mrf.mxu0
    %v453 = vadd.f32 0.0, %v452
    %v454 = vpop.f32.mrf.mxu0
    %455 = vmatprep.mubr.bf16.mxu0 0
    %456 = vmatmul.mubr.bf16.gmra.mxu0 %v262
    %v457 = vpop.f32.mrf.mxu0
    %v458 = vadd.f32 0.0, %v457
    %v459 = vpop.f32.mrf.mxu0
    %v460 = vpop.f32.mrf.mxu0
    %v461 = vadd.f32 0.0, %v460
    %v462 = vpop.f32.mrf.mxu0
    %463 = vmatprep.mubr.bf16.mxu0 0
    %464 = vmatmul.mubr.bf16.gmra.mxu0 %v263
    %v465 = vpop.f32.mrf.mxu0
    %v466 = vadd.f32 0.0, %v465
    %v467 = vpop.f32.mrf.mxu0
    %v468 = vpop.f32.mrf.mxu0
    %v469 = vadd.f32 0.0, %v468
    %v470 = vpop.f32.mrf.mxu0
    %471 = vmatprep.mubr.bf16.mxu0 0
    %472 = vmatmul.mubr.bf16.gmra.mxu0 %v264
    %v473 = vpop.f32.mrf.mxu0
    %v474 = vadd.f32 0.0, %v473
    %v475 = vpop.f32.mrf.mxu0
    %v476 = vpop.f32.mrf.mxu0
    %v477 = vadd.f32 0.0, %v476
    %v478 = vpop.f32.mrf.mxu0
    %479 = vmatprep.mubr.bf16.mxu0 0
    %480 = vmatmul.mubr.bf16.gmra.mxu0 %v265
    %v481 = vpop.f32.mrf.mxu0
    %v482 = vadd.f32 0.0, %v481
    %v483 = vpop.f32.mrf.mxu0
    %v484 = vpop.f32.mrf.mxu0
    %v485 = vadd.f32 0.0, %v484
    %v486 = vpop.f32.mrf.mxu0
    %487 = vmatprep.mubr.bf16.mxu0 0
    %488 = vmatmul.mubr.bf16.gmra.mxu0 %v266
    %v489 = vpop.f32.mrf.mxu0
    %v490 = vadd.f32 0.0, %v489
    %v491 = vpop.f32.mrf.mxu0
    %v492 = vpop.f32.mrf.mxu0
    %v493 = vadd.f32 0.0, %v492
    %v494 = vpop.f32.mrf.mxu0
    %495 = vmatprep.mubr.bf16.mxu0 0
    %496 = vmatmul.mubr.bf16.gmra.mxu0 %v267
    %v497 = vpop.f32.mrf.mxu0
    %v498 = vadd.f32 0.0, %v497
    %v499 = vpop.f32.mrf.mxu0
    %v500 = vpop.f32.mrf.mxu0
    %v501 = vadd.f32 0.0, %v500
    %v502 = vpop.f32.mrf.mxu0
    %503 = vmatprep.mubr.bf16.mxu0 0
    %504 = vmatmul.mubr.bf16.gmra.mxu0 %v268
    %v505 = vpop.f32.mrf.mxu0
    %v506 = vadd.f32 0.0, %v505
    %v507 = vpop.f32.mrf.mxu0
    %v508 = vpop.f32.mrf.mxu0
    %v509 = vadd.f32 0.0, %v508
    %v510 = vpop.f32.mrf.mxu0
    %511 = vmatprep.mubr.bf16.mxu0 0
    %512 = vmatmul.mubr.bf16.gmra.mxu0 %v269
    %v513 = vpop.f32.mrf.mxu0
    %v514 = vadd.f32 0.0, %v513
    %v515 = vpop.f32.mrf.mxu0
    %v516 = vpop.f32.mrf.mxu0
    %v517 = vadd.f32 0.0, %v516
    %v518 = vpop.f32.mrf.mxu0
    %519 = vmatprep.mubr.bf16.mxu0 0
    %520 = vmatmul.mubr.bf16.gmra.mxu0 %v270
    %v521 = vpop.f32.mrf.mxu0
    %v522 = vadd.f32 0.0, %v521
    %v523 = vpop.f32.mrf.mxu0
    %v524 = vpop.f32.mrf.mxu0
    %v525 = vadd.f32 0.0, %v524
    %v526 = vpop.f32.mrf.mxu0
    %527 = vmatprep.mubr.bf16.mxu0 0
    %528 = vmatmul.mubr.bf16.gmra.mxu0 %v271
    %v529 = vpop.f32.mrf.mxu0
    %v530 = vadd.f32 0.0, %v529
    %v531 = vpop.f32.mrf.mxu0
    %v532 = vpop.f32.mrf.mxu0
    %v533 = vadd.f32 0.0, %v532
    %v534 = vpop.f32.mrf.mxu0
    %535 = vmatprep.mubr.bf16.mxu0 0
    %536 = vmatmul.mubr.bf16.gmra.mxu0 %v272
    %v537 = vpop.f32.mrf.mxu0
    %v538 = vadd.f32 0.0, %v537
    %v539 = vpop.f32.mrf.mxu0
    %v540 = vpop.f32.mrf.mxu0
    %v541 = vadd.f32 0.0, %v540
    %v542 = vpop.f32.mrf.mxu0
    %543 = vmatprep.mubr.bf16.mxu0 0
    %544 = vmatmul.mubr.bf16.gmra.mxu0 %v273
    %v545 = vpop.f32.mrf.mxu0
    %v546 = vadd.f32 0.0, %v545
    %v547 = vpop.f32.mrf.mxu0
    %v548 = vpop.f32.mrf.mxu0
    %v549 = vadd.f32 0.0, %v548
    %v550 = vpop.f32.mrf.mxu0
    %551 = vmatprep.mubr.bf16.mxu0 0
    %552 = vmatmul.mubr.bf16.gmra.mxu0 %v274
    %v553 = vpop.f32.mrf.mxu0
    %v554 = vadd.f32 0.0, %v553
    %v555 = vpop.f32.mrf.mxu0
    %v556 = vpop.f32.mrf.mxu0
    %v557 = vadd.f32 0.0, %v556
    %v558 = vpop.f32.mrf.mxu0
    %559 = vmatprep.mubr.bf16.mxu0 0
    %560 = vmatmul.mubr.bf16.gmra.mxu0 %v275
    %v561 = vpop.f32.mrf.mxu0
    %v562 = vadd.f32 0.0, %v561
    %v563 = vpop.f32.mrf.mxu0
    %v564 = vpop.f32.mrf.mxu0
    %v565 = vadd.f32 0.0, %v564
    %v566 = vpop.f32.mrf.mxu0
    %567 = vmatprep.mubr.bf16.mxu0 0
    %568 = vmatmul.mubr.bf16.gmra.mxu0 %v276
    %v569 = vpop.f32.mrf.mxu0
    %v570 = vadd.f32 0.0, %v569
    %v571 = vpop.f32.mrf.mxu0
    %v572 = vpop.f32.mrf.mxu0
    %v573 = vadd.f32 0.0, %v572
    %v574 = vpop.f32.mrf.mxu0
    %575 = vmatprep.mubr.bf16.mxu0 0
    %576 = vmatmul.mubr.bf16.gmra.mxu0 %v277
    %v577 = vpop.f32.mrf.mxu0
    %v578 = vadd.f32 0.0, %v577
    %v579 = vpop.f32.mrf.mxu0
    %v580 = vpop.f32.mrf.mxu0
    %v581 = vadd.f32 0.0, %v580
    %v582 = vpop.f32.mrf.mxu0
    %583 = vmatprep.mubr.bf16.mxu0 0
    %584 = vmatmul.mubr.bf16.gmra.mxu0 %v278
    %v585 = vpop.f32.mrf.mxu0
    %v586 = vadd.f32 0.0, %v585
    %v587 = vpop.f32.mrf.mxu0
    %v588 = vpop.f32.mrf.mxu0
    %v589 = vadd.f32 0.0, %v588
    %v590 = vpop.f32.mrf.mxu0
    %591 = vmatprep.mubr.bf16.mxu0 0
    %592 = vmatmul.mubr.bf16.gmra.mxu0 %v279
    %v593 = vpop.f32.mrf.mxu0
    %v594 = vadd.f32 0.0, %v593
    %v595 = vpop.f32.mrf.mxu0
    %v596 = vpop.f32.mrf.mxu0
    %v597 = vadd.f32 0.0, %v596
    %v598 = vpop.f32.mrf.mxu0
    %599 = vmatprep.mubr.bf16.mxu0 0
    %600 = vmatmul.mubr.bf16.gmra.mxu0 %v280
    %v601 = vpop.f32.mrf.mxu0
    %v602 = vadd.f32 0.0, %v601
    %v603 = vpop.f32.mrf.mxu0
    %v604 = vpop.f32.mrf.mxu0
    %v605 = vadd.f32 0.0, %v604
    %v606 = vpop.f32.mrf.mxu0
    %607 = vmatprep.mubr.bf16.mxu0 0
    %608 = vmatmul.mubr.bf16.gmra.mxu0 %v281
    %v609 = vpop.f32.mrf.mxu0
    %v610 = vadd.f32 0.0, %v609
    %v611 = vpop.f32.mrf.mxu0
    %v612 = vpop.f32.mrf.mxu0
    %v613 = vadd.f32 0.0, %v612
    %v614 = vpop.f32.mrf.mxu0
    %615 = vmatprep.mubr.bf16.mxu0 0
    %616 = vmatmul.mubr.bf16.gmra.mxu0 %v282
    %v617 = vpop.f32.mrf.mxu0
    %v618 = vadd.f32 0.0, %v617
    %v619 = vpop.f32.mrf.mxu0
    %v620 = vpop.f32.mrf.mxu0
    %v621 = vadd.f32 0.0, %v620
    %v622 = vpop.f32.mrf.mxu0
    %623 = vmatprep.mubr.bf16.mxu0 0
    %624 = vmatmul.mubr.bf16.gmra.mxu0 %v283
    %v625 = vpop.f32.mrf.mxu0
    %v626 = vadd.f32 0.0, %v625
    %v627 = vpop.f32.mrf.mxu0
    %v628 = vpop.f32.mrf.mxu0
    %v629 = vadd.f32 0.0, %v628
    %v630 = vpop.f32.mrf.mxu0
    %631 = vmatprep.mubr.bf16.mxu0 0
    %632 = vmatmul.mubr.bf16.gmra.mxu0 %v284
    %v633 = vpop.f32.mrf.mxu0
    %v634 = vadd.f32 0.0, %v633
    %v635 = vpop.f32.mrf.mxu0
    %v636 = vpop.f32.mrf.mxu0
    %v637 = vadd.f32 0.0, %v636
    %v638 = vpop.f32.mrf.mxu0
    %639 = vmatprep.mubr.bf16.mxu0 0
    %640 = vmatmul.mubr.bf16.gmra.mxu0 %v285
    %v641 = vpop.f32.mrf.mxu0
    %v642 = vadd.f32 0.0, %v641
    %v643 = vpop.f32.mrf.mxu0
    %v644 = vpop.f32.mrf.mxu0
    %v645 = vadd.f32 0.0, %v644
    %v646 = vpop.f32.mrf.mxu0
    %647 = vmatprep.mubr.bf16.mxu0 0
    %648 = vmatmul.mubr.bf16.gmra.mxu0 %v286
    %v649 = vpop.f32.mrf.mxu0
    %v650 = vadd.f32 0.0, %v649
    %v651 = vpop.f32.mrf.mxu0
    %v652 = vpop.f32.mrf.mxu0
    %v653 = vadd.f32 0.0, %v652
    %v654 = vpop.f32.mrf.mxu0
    %655 = vdwg.mxu0
    %v656 = vld [vmem:[%s2] sm:$0x1]
    %v658 = vlaneseq
    %v659 = vshrl.u32 %v658, 7
    %v660 = vsub.s32 0, %v659
    %v661 = vrot.slane %v656, %v660
    %v663 = vmul.f32 %v402, %v661
    %v664 = vmul.f32 %v405, %v661
    %v665 = vmul.f32 %v410, %v661
    %v666 = vmul.f32 %v413, %v661
    %v667 = vmul.f32 %v418, %v661
    %v668 = vmul.f32 %v421, %v661
    %v669 = vmul.f32 %v426, %v661
    %v670 = vmul.f32 %v429, %v661
    %v671 = vmul.f32 %v434, %v661
    %v672 = vmul.f32 %v437, %v661
    %v673 = vmul.f32 %v442, %v661
    %v674 = vmul.f32 %v445, %v661
    %v675 = vmul.f32 %v450, %v661
    %v676 = vmul.f32 %v453, %v661
    %v677 = vmul.f32 %v458, %v661
    %v678 = vmul.f32 %v461, %v661
    %v679 = vmul.f32 %v466, %v661
    %v680 = vmul.f32 %v469, %v661
    %v681 = vmul.f32 %v474, %v661
    %v682 = vmul.f32 %v477, %v661
    %v683 = vmul.f32 %v482, %v661
    %v684 = vmul.f32 %v485, %v661
    %v685 = vmul.f32 %v490, %v661
    %v686 = vmul.f32 %v493, %v661
    %v687 = vmul.f32 %v498, %v661
    %v688 = vmul.f32 %v501, %v661
    %v689 = vmul.f32 %v506, %v661
    %v690 = vmul.f32 %v509, %v661
    %v691 = vmul.f32 %v514, %v661
    %v692 = vmul.f32 %v517, %v661
    %v693 = vmul.f32 %v522, %v661
    %v694 = vmul.f32 %v525, %v661
    %v695 = vmul.f32 %v530, %v661
    %v696 = vmul.f32 %v533, %v661
    %v697 = vmul.f32 %v538, %v661
    %v698 = vmul.f32 %v541, %v661
    %v699 = vmul.f32 %v546, %v661
    %v700 = vmul.f32 %v549, %v661
    %v701 = vmul.f32 %v554, %v661
    %v702 = vmul.f32 %v557, %v661
    %v703 = vmul.f32 %v562, %v661
    %v704 = vmul.f32 %v565, %v661
    %v705 = vmul.f32 %v570, %v661
    %v706 = vmul.f32 %v573, %v661
    %v707 = vmul.f32 %v578, %v661
    %v708 = vmul.f32 %v581, %v661
    %v709 = vmul.f32 %v586, %v661
    %v710 = vmul.f32 %v589, %v661
    %v711 = vmul.f32 %v594, %v661
    %v712 = vmul.f32 %v597, %v661
    %v713 = vmul.f32 %v602, %v661
    %v714 = vmul.f32 %v605, %v661
    %v715 = vmul.f32 %v610, %v661
    %v716 = vmul.f32 %v613, %v661
    %v717 = vmul.f32 %v618, %v661
    %v718 = vmul.f32 %v621, %v661
    %v719 = vmul.f32 %v626, %v661
    %v720 = vmul.f32 %v629, %v661
    %v721 = vmul.f32 %v634, %v661
    %v722 = vmul.f32 %v637, %v661
    %v723 = vmul.f32 %v642, %v661
    %v724 = vmul.f32 %v645, %v661
    %v725 = vmul.f32 %v650, %v661
    %v726 = vmul.f32 %v653, %v661
    %v727 = vld [vmem:[%s3] sm:$0x1]
    %v729 = vlaneseq
    %v730 = vshrl.u32 %v729, 7
    %v731 = vsub.s32 0, %v730
    %v732 = vrot.slane %v727, %v731
    %v734 = vadd.f32 %v663, %v732
    %v735 = vadd.f32 %v664, %v732
    %v736 = vadd.f32 %v665, %v732
    %v737 = vadd.f32 %v666, %v732
    %v738 = vadd.f32 %v667, %v732
    %v739 = vadd.f32 %v668, %v732
    %v740 = vadd.f32 %v669, %v732
    %v741 = vadd.f32 %v670, %v732
    %v742 = vadd.f32 %v671, %v732
    %v743 = vadd.f32 %v672, %v732
    %v744 = vadd.f32 %v673, %v732
    %v745 = vadd.f32 %v674, %v732
    %v746 = vadd.f32 %v675, %v732
    %v747 = vadd.f32 %v676, %v732
    %v748 = vadd.f32 %v677, %v732
    %v749 = vadd.f32 %v678, %v732
    %v750 = vadd.f32 %v679, %v732
    %v751 = vadd.f32 %v680, %v732
    %v752 = vadd.f32 %v681, %v732
    %v753 = vadd.f32 %v682, %v732
    %v754 = vadd.f32 %v683, %v732
    %v755 = vadd.f32 %v684, %v732
    %v756 = vadd.f32 %v685, %v732
    %v757 = vadd.f32 %v686, %v732
    %v758 = vadd.f32 %v687, %v732
    %v759 = vadd.f32 %v688, %v732
    %v760 = vadd.f32 %v689, %v732
    %v761 = vadd.f32 %v690, %v732
    %v762 = vadd.f32 %v691, %v732
    %v763 = vadd.f32 %v692, %v732
    %v764 = vadd.f32 %v693, %v732
    %v765 = vadd.f32 %v694, %v732
    %v766 = vadd.f32 %v695, %v732
    %v767 = vadd.f32 %v696, %v732
    %v768 = vadd.f32 %v697, %v732
    %v769 = vadd.f32 %v698, %v732
    %v770 = vadd.f32 %v699, %v732
    %v771 = vadd.f32 %v700, %v732
    %v772 = vadd.f32 %v701, %v732
    %v773 = vadd.f32 %v702, %v732
    %v774 = vadd.f32 %v703, %v732
    %v775 = vadd.f32 %v704, %v732
    %v776 = vadd.f32 %v705, %v732
    %v777 = vadd.f32 %v706, %v732
    %v778 = vadd.f32 %v707, %v732
    %v779 = vadd.f32 %v708, %v732
    %v780 = vadd.f32 %v709, %v732
    %v781 = vadd.f32 %v710, %v732
    %v782 = vadd.f32 %v711, %v732
    %v783 = vadd.f32 %v712, %v732
    %v784 = vadd.f32 %v713, %v732
    %v785 = vadd.f32 %v714, %v732
    %v786 = vadd.f32 %v715, %v732
    %v787 = vadd.f32 %v716, %v732
    %v788 = vadd.f32 %v717, %v732
    %v789 = vadd.f32 %v718, %v732
    %v790 = vadd.f32 %v719, %v732
    %v791 = vadd.f32 %v720, %v732
    %v792 = vadd.f32 %v721, %v732
    %v793 = vadd.f32 %v722, %v732
    %v794 = vadd.f32 %v723, %v732
    %v795 = vadd.f32 %v724, %v732
    %v796 = vadd.f32 %v725, %v732
    %v797 = vadd.f32 %v726, %v732
    %v798 = vmax.f32 %v734, 0.0
    %v799 = vmax.f32 %v735, 0.0
    %v800 = vmax.f32 %v736, 0.0
    %v801 = vmax.f32 %v737, 0.0
    %v802 = vmax.f32 %v738, 0.0
    %v803 = vmax.f32 %v739, 0.0
    %v804 = vmax.f32 %v740, 0.0
    %v805 = vmax.f32 %v741, 0.0
    %v806 = vmax.f32 %v742, 0.0
    %v807 = vmax.f32 %v743, 0.0
    %v808 = vmax.f32 %v744, 0.0
    %v809 = vmax.f32 %v745, 0.0
    %v810 = vmax.f32 %v746, 0.0
    %v811 = vmax.f32 %v747, 0.0
    %v812 = vmax.f32 %v748, 0.0
    %v813 = vmax.f32 %v749, 0.0
    %v814 = vmax.f32 %v750, 0.0
    %v815 = vmax.f32 %v751, 0.0
    %v816 = vmax.f32 %v752, 0.0
    %v817 = vmax.f32 %v753, 0.0
    %v818 = vmax.f32 %v754, 0.0
    %v819 = vmax.f32 %v755, 0.0
    %v820 = vmax.f32 %v756, 0.0
    %v821 = vmax.f32 %v757, 0.0
    %v822 = vmax.f32 %v758, 0.0
    %v823 = vmax.f32 %v759, 0.0
    %v824 = vmax.f32 %v760, 0.0
    %v825 = vmax.f32 %v761, 0.0
    %v826 = vmax.f32 %v762, 0.0
    %v827 = vmax.f32 %v763, 0.0
    %v828 = vmax.f32 %v764, 0.0
    %v829 = vmax.f32 %v765, 0.0
    %v830 = vmax.f32 %v766, 0.0
    %v831 = vmax.f32 %v767, 0.0
    %v832 = vmax.f32 %v768, 0.0
    %v833 = vmax.f32 %v769, 0.0
    %v834 = vmax.f32 %v770, 0.0
    %v835 = vmax.f32 %v771, 0.0
    %v836 = vmax.f32 %v772, 0.0
    %v837 = vmax.f32 %v773, 0.0
    %v838 = vmax.f32 %v774, 0.0
    %v839 = vmax.f32 %v775, 0.0
    %v840 = vmax.f32 %v776, 0.0
    %v841 = vmax.f32 %v777, 0.0
    %v842 = vmax.f32 %v778, 0.0
    %v843 = vmax.f32 %v779, 0.0
    %v844 = vmax.f32 %v780, 0.0
    %v845 = vmax.f32 %v781, 0.0
    %v846 = vmax.f32 %v782, 0.0
    %v847 = vmax.f32 %v783, 0.0
    %v848 = vmax.f32 %v784, 0.0
    %v849 = vmax.f32 %v785, 0.0
    %v850 = vmax.f32 %v786, 0.0
    %v851 = vmax.f32 %v787, 0.0
    %v852 = vmax.f32 %v788, 0.0
    %v853 = vmax.f32 %v789, 0.0
    %v854 = vmax.f32 %v790, 0.0
    %v855 = vmax.f32 %v791, 0.0
    %v856 = vmax.f32 %v792, 0.0
    %v857 = vmax.f32 %v793, 0.0
    %v858 = vmax.f32 %v794, 0.0
    %v859 = vmax.f32 %v795, 0.0
    %v860 = vmax.f32 %v796, 0.0
    %v861 = vmax.f32 %v797, 0.0
    %v862 = vpack.c.bf16 %v799, %v798
    %v863 = vpack.c.bf16 %v801, %v800
    %v864 = vpack.c.bf16 %v803, %v802
    %v865 = vpack.c.bf16 %v805, %v804
    %v866 = vpack.c.bf16 %v807, %v806
    %v867 = vpack.c.bf16 %v809, %v808
    %v868 = vpack.c.bf16 %v811, %v810
    %v869 = vpack.c.bf16 %v813, %v812
    %v870 = vpack.c.bf16 %v815, %v814
    %v871 = vpack.c.bf16 %v817, %v816
    %v872 = vpack.c.bf16 %v819, %v818
    %v873 = vpack.c.bf16 %v821, %v820
    %v874 = vpack.c.bf16 %v823, %v822
    %v875 = vpack.c.bf16 %v825, %v824
    %v876 = vpack.c.bf16 %v827, %v826
    %v877 = vpack.c.bf16 %v829, %v828
    %v878 = vpack.c.bf16 %v831, %v830
    %v879 = vpack.c.bf16 %v833, %v832
    %v880 = vpack.c.bf16 %v835, %v834
    %v881 = vpack.c.bf16 %v837, %v836
    %v882 = vpack.c.bf16 %v839, %v838
    %v883 = vpack.c.bf16 %v841, %v840
    %v884 = vpack.c.bf16 %v843, %v842
    %v885 = vpack.c.bf16 %v845, %v844
    %v886 = vpack.c.bf16 %v847, %v846
    %v887 = vpack.c.bf16 %v849, %v848
    %v888 = vpack.c.bf16 %v851, %v850
    %v889 = vpack.c.bf16 %v853, %v852
    %v890 = vpack.c.bf16 %v855, %v854
    %v891 = vpack.c.bf16 %v857, %v856
    %v892 = vpack.c.bf16 %v859, %v858
    %v893 = vpack.c.bf16 %v861, %v860
    %v926 = vunpack.c.l.b16 %v862
    %v927 = vunpack.c.h.b16 %v862
    %v928 = vunpack.c.l.b16 %v863
    %v929 = vunpack.c.h.b16 %v863
    %v930 = vunpack.c.l.b16 %v864
    %v931 = vunpack.c.h.b16 %v864
    %v932 = vunpack.c.l.b16 %v865
    %v933 = vunpack.c.h.b16 %v865
    %v934 = vunpack.c.l.b16 %v866
    %v935 = vunpack.c.h.b16 %v866
    %v936 = vunpack.c.l.b16 %v867
    %v937 = vunpack.c.h.b16 %v867
    %v938 = vunpack.c.l.b16 %v868
    %v939 = vunpack.c.h.b16 %v868
    %v940 = vunpack.c.l.b16 %v869
    %v941 = vunpack.c.h.b16 %v869
    %v942 = vunpack.c.l.b16 %v870
    %v943 = vunpack.c.h.b16 %v870
    %v944 = vunpack.c.l.b16 %v871
    %v945 = vunpack.c.h.b16 %v871
    %v946 = vunpack.c.l.b16 %v872
    %v947 = vunpack.c.h.b16 %v872
    %v948 = vunpack.c.l.b16 %v873
    %v949 = vunpack.c.h.b16 %v873
    %v950 = vunpack.c.l.b16 %v874
    %v951 = vunpack.c.h.b16 %v874
    %v952 = vunpack.c.l.b16 %v875
    %v953 = vunpack.c.h.b16 %v875
    %v954 = vunpack.c.l.b16 %v876
    %v955 = vunpack.c.h.b16 %v876
    %v956 = vunpack.c.l.b16 %v877
    %v957 = vunpack.c.h.b16 %v877
    %v958 = vunpack.c.l.b16 %v878
    %v959 = vunpack.c.h.b16 %v878
    %v960 = vunpack.c.l.b16 %v879
    %v961 = vunpack.c.h.b16 %v879
    %v962 = vunpack.c.l.b16 %v880
    %v963 = vunpack.c.h.b16 %v880
    %v964 = vunpack.c.l.b16 %v881
    %v965 = vunpack.c.h.b16 %v881
    %v966 = vunpack.c.l.b16 %v882
    %v967 = vunpack.c.h.b16 %v882
    %v968 = vunpack.c.l.b16 %v883
    %v969 = vunpack.c.h.b16 %v883
    %v970 = vunpack.c.l.b16 %v884
    %v971 = vunpack.c.h.b16 %v884
    %v972 = vunpack.c.l.b16 %v885
    %v973 = vunpack.c.h.b16 %v885
    %v974 = vunpack.c.l.b16 %v886
    %v975 = vunpack.c.h.b16 %v886
    %v976 = vunpack.c.l.b16 %v887
    %v977 = vunpack.c.h.b16 %v887
    %v978 = vunpack.c.l.b16 %v888
    %v979 = vunpack.c.h.b16 %v888
    %v980 = vunpack.c.l.b16 %v889
    %v981 = vunpack.c.h.b16 %v889
    %v982 = vunpack.c.l.b16 %v890
    %v983 = vunpack.c.h.b16 %v890
    %v984 = vunpack.c.l.b16 %v891
    %v985 = vunpack.c.h.b16 %v891
    %v986 = vunpack.c.l.b16 %v892
    %v987 = vunpack.c.h.b16 %v892
    %v988 = vunpack.c.l.b16 %v893
    %v989 = vunpack.c.h.b16 %v893
    %v990 = vpack.c.b16 %v926, %v926
    %v991 = vpack.c.b16 %v927, %v927
    %v992 = vpack.c.b16 %v928, %v928
    %v993 = vpack.c.b16 %v929, %v929
    %v994 = vpack.c.b16 %v930, %v930
    %v995 = vpack.c.b16 %v931, %v931
    %v996 = vpack.c.b16 %v932, %v932
    %v997 = vpack.c.b16 %v933, %v933
    %v998 = vpack.c.b16 %v934, %v934
    %v999 = vpack.c.b16 %v935, %v935
    %v1000 = vpack.c.b16 %v936, %v936
    %v1001 = vpack.c.b16 %v937, %v937
    %v1002 = vpack.c.b16 %v938, %v938
    %v1003 = vpack.c.b16 %v939, %v939
    %v1004 = vpack.c.b16 %v940, %v940
    %v1005 = vpack.c.b16 %v941, %v941
    %v1006 = vpack.c.b16 %v942, %v942
    %v1007 = vpack.c.b16 %v943, %v943
    %v1008 = vpack.c.b16 %v944, %v944
    %v1009 = vpack.c.b16 %v945, %v945
    %v1010 = vpack.c.b16 %v946, %v946
    %v1011 = vpack.c.b16 %v947, %v947
    %v1012 = vpack.c.b16 %v948, %v948
    %v1013 = vpack.c.b16 %v949, %v949
    %v1014 = vpack.c.b16 %v950, %v950
    %v1015 = vpack.c.b16 %v951, %v951
    %v1016 = vpack.c.b16 %v952, %v952
    %v1017 = vpack.c.b16 %v953, %v953
    %v1018 = vpack.c.b16 %v954, %v954
    %v1019 = vpack.c.b16 %v955, %v955
    %v1020 = vpack.c.b16 %v956, %v956
    %v1021 = vpack.c.b16 %v957, %v957
    %v1022 = vpack.c.b16 %v958, %v958
    %v1023 = vpack.c.b16 %v959, %v959
    %v1024 = vpack.c.b16 %v960, %v960
    %v1025 = vpack.c.b16 %v961, %v961
    %v1026 = vpack.c.b16 %v962, %v962
    %v1027 = vpack.c.b16 %v963, %v963
    %v1028 = vpack.c.b16 %v964, %v964
    %v1029 = vpack.c.b16 %v965, %v965
    %v1030 = vpack.c.b16 %v966, %v966
    %v1031 = vpack.c.b16 %v967, %v967
    %v1032 = vpack.c.b16 %v968, %v968
    %v1033 = vpack.c.b16 %v969, %v969
    %v1034 = vpack.c.b16 %v970, %v970
    %v1035 = vpack.c.b16 %v971, %v971
    %v1036 = vpack.c.b16 %v972, %v972
    %v1037 = vpack.c.b16 %v973, %v973
    %v1038 = vpack.c.b16 %v974, %v974
    %v1039 = vpack.c.b16 %v975, %v975
    %v1040 = vpack.c.b16 %v976, %v976
    %v1041 = vpack.c.b16 %v977, %v977
    %v1042 = vpack.c.b16 %v978, %v978
    %v1043 = vpack.c.b16 %v979, %v979
    %v1044 = vpack.c.b16 %v980, %v980
    %v1045 = vpack.c.b16 %v981, %v981
    %v1046 = vpack.c.b16 %v982, %v982
    %v1047 = vpack.c.b16 %v983, %v983
    %v1048 = vpack.c.b16 %v984, %v984
    %v1049 = vpack.c.b16 %v985, %v985
    %v1050 = vpack.c.b16 %v986, %v986
    %v1051 = vpack.c.b16 %v987, %v987
    %v1052 = vpack.c.b16 %v988, %v988
    %v1053 = vpack.c.b16 %v989, %v989
    %1118 = vst [vmem:[#allocation7] sm:$0xf] %v990
    %1119 = vst [vmem:[#allocation7 + $0x4] sm:$0xf] %v991
    %1120 = vst [vmem:[#allocation7 + $0x8] sm:$0xf] %v992
    %1121 = vst [vmem:[#allocation7 + $0xc] sm:$0xf] %v993
    %1122 = vst [vmem:[#allocation7 + $0x10] sm:$0xf] %v994
    %1123 = vst [vmem:[#allocation7 + $0x14] sm:$0xf] %v995
    %1124 = vst [vmem:[#allocation7 + $0x18] sm:$0xf] %v996
    %1125 = vst [vmem:[#allocation7 + $0x1c] sm:$0xf] %v997
    %1126 = vst [vmem:[#allocation7 + $0x20] sm:$0xf] %v998
    %1127 = vst [vmem:[#allocation7 + $0x24] sm:$0xf] %v999
    %1128 = vst [vmem:[#allocation7 + $0x28] sm:$0xf] %v1000
    %1129 = vst [vmem:[#allocation7 + $0x2c] sm:$0xf] %v1001
    %1130 = vst [vmem:[#allocation7 + $0x30] sm:$0xf] %v1002
    %1131 = vst [vmem:[#allocation7 + $0x34] sm:$0xf] %v1003
    %1132 = vst [vmem:[#allocation7 + $0x38] sm:$0xf] %v1004
    %1133 = vst [vmem:[#allocation7 + $0x3c] sm:$0xf] %v1005
    %1134 = vst [vmem:[#allocation7 + $0x40] sm:$0xf] %v1006
    %1135 = vst [vmem:[#allocation7 + $0x44] sm:$0xf] %v1007
    %1136 = vst [vmem:[#allocation7 + $0x48] sm:$0xf] %v1008
    %1137 = vst [vmem:[#allocation7 + $0x4c] sm:$0xf] %v1009
    %1138 = vst [vmem:[#allocation7 + $0x50] sm:$0xf] %v1010
    %1139 = vst [vmem:[#allocation7 + $0x54] sm:$0xf] %v1011
    %1140 = vst [vmem:[#allocation7 + $0x58] sm:$0xf] %v1012
    %1141 = vst [vmem:[#allocation7 + $0x5c] sm:$0xf] %v1013
    %1142 = vst [vmem:[#allocation7 + $0x60] sm:$0xf] %v1014
    %1143 = vst [vmem:[#allocation7 + $0x64] sm:$0xf] %v1015
    %1144 = vst [vmem:[#allocation7 + $0x68] sm:$0xf] %v1016
    %1145 = vst [vmem:[#allocation7 + $0x6c] sm:$0xf] %v1017
    %1146 = vst [vmem:[#allocation7 + $0x70] sm:$0xf] %v1018
    %1147 = vst [vmem:[#allocation7 + $0x74] sm:$0xf] %v1019
    %1148 = vst [vmem:[#allocation7 + $0x78] sm:$0xf] %v1020
    %1149 = vst [vmem:[#allocation7 + $0x7c] sm:$0xf] %v1021
    %1150 = vst [vmem:[#allocation7 + $0x80] sm:$0xf] %v1022
    %1151 = vst [vmem:[#allocation7 + $0x84] sm:$0xf] %v1023
    %1152 = vst [vmem:[#allocation7 + $0x88] sm:$0xf] %v1024
    %1153 = vst [vmem:[#allocation7 + $0x8c] sm:$0xf] %v1025
    %1154 = vst [vmem:[#allocation7 + $0x90] sm:$0xf] %v1026
    %1155 = vst [vmem:[#allocation7 + $0x94] sm:$0xf] %v1027
    %1156 = vst [vmem:[#allocation7 + $0x98] sm:$0xf] %v1028
    %1157 = vst [vmem:[#allocation7 + $0x9c] sm:$0xf] %v1029
    %1158 = vst [vmem:[#allocation7 + $0xa0] sm:$0xf] %v1030
    %1159 = vst [vmem:[#allocation7 + $0xa4] sm:$0xf] %v1031
    %1160 = vst [vmem:[#allocation7 + $0xa8] sm:$0xf] %v1032
    %1161 = vst [vmem:[#allocation7 + $0xac] sm:$0xf] %v1033
    %1162 = vst [vmem:[#allocation7 + $0xb0] sm:$0xf] %v1034
    %1163 = vst [vmem:[#allocation7 + $0xb4] sm:$0xf] %v1035
    %1164 = vst [vmem:[#allocation7 + $0xb8] sm:$0xf] %v1036
    %1165 = vst [vmem:[#allocation7 + $0xbc] sm:$0xf] %v1037
    %1166 = vst [vmem:[#allocation7 + $0xc0] sm:$0xf] %v1038
    %1167 = vst [vmem:[#allocation7 + $0xc4] sm:$0xf] %v1039
    %1168 = vst [vmem:[#allocation7 + $0xc8] sm:$0xf] %v1040
    %1169 = vst [vmem:[#allocation7 + $0xcc] sm:$0xf] %v1041
    %1170 = vst [vmem:[#allocation7 + $0xd0] sm:$0xf] %v1042
    %1171 = vst [vmem:[#allocation7 + $0xd4] sm:$0xf] %v1043
    %1172 = vst [vmem:[#allocation7 + $0xd8] sm:$0xf] %v1044
    %1173 = vst [vmem:[#allocation7 + $0xdc] sm:$0xf] %v1045
    %1174 = vst [vmem:[#allocation7 + $0xe0] sm:$0xf] %v1046
    %1175 = vst [vmem:[#allocation7 + $0xe4] sm:$0xf] %v1047
    %1176 = vst [vmem:[#allocation7 + $0xe8] sm:$0xf] %v1048
    %1177 = vst [vmem:[#allocation7 + $0xec] sm:$0xf] %v1049
    %1178 = vst [vmem:[#allocation7 + $0xf0] sm:$0xf] %v1050
    %1179 = vst [vmem:[#allocation7 + $0xf4] sm:$0xf] %v1051
    %1180 = vst [vmem:[#allocation7 + $0xf8] sm:$0xf] %v1052
    %1181 = vst [vmem:[#allocation7 + $0xfc] sm:$0xf] %v1053
    // Predicated region
    $region26: #{tpu_custom_call.1} parent=1 // pred_check
      _
    $region27: #{tpu_custom_call.1} parent=1 // pred_check_branch
      %1183 = sbr.rel (0) target = $region29
    $region28: #{tpu_custom_call.1} parent=1 // pred_region
      %s1185 = ssub.s32 4096, 4096
      %1186 = vsyncadd [#allocation4], %s1185
      %s1187 = sshll.u32 [#allocation7], 4
      %s1188 = int_to_ptr.vmem [resolvable:$true] %s1187
      %1193 = dma.vmem_to_hbm [thread:$0]  %s1188, 4096, %s4, [#allocation4], 64, 64, 4
    $region29: #{tpu_custom_call.1} parent=1 // pred_fallthru
      _
    // Predicated region
    $region30: #{tpu_custom_call.1} parent=1 // pred_check
      _
    $region31: #{tpu_custom_call.1} parent=1 // pred_check_branch
      %1195 = sbr.rel (0) target = $region33
    $region32: #{tpu_custom_call.1} parent=1 // pred_region
      %1196 = dma.done [#allocation4], 4096
    $region33: #{tpu_custom_call.1} parent=1 // pred_fallthru
      _
    %1197 = vsyncpa [#allocation3], 1
    %1198 = vsyncpa [#allocation6], 1
    %1199 = vsyncpa [#allocation4], 1

</llo_original>
